<compile_context>
chip_gen: v5e
topology: v5e:2x2
jax: 0.10.0
libtpu: 0.0.40
codegen_flags: <defaults>
</compile_context>

<pallas_src>
import functools
import math

import jax
import jax.numpy as jnp
from jax import lax
from jax.experimental import pallas as pl
from jax.experimental.pallas import tpu as pltpu


def mlp_kernel(x_ref, w1_ref, b1_ref, w2_ref, b2_ref, o_ref, acc_ref, *,
               precision):
    hstep = pl.program_id(1)

    @pl.when(hstep == 0)
    def _():
        acc_ref[...] = jnp.zeros_like(acc_ref)

    # First matmul: native-dtype operands, f32 accumulation on the MXU.
    h = jnp.dot(x_ref[...], w1_ref[...],
                preferred_element_type=jnp.float32, precision=precision)
    h = h + b1_ref[...].astype(jnp.float32)          # (tm, th) + (1, th)

    # nn.GELU() default is the exact erf formulation (kept for parity).
    h = 0.5 * h * (1.0 + lax.erf(h * (1.0 / math.sqrt(2.0))))

    # Partial second matmul for this H chunk, accumulated in f32 VMEM scratch.
    acc_ref[...] += jnp.dot(h.astype(w2_ref.dtype), w2_ref[...],
                            preferred_element_type=jnp.float32,
                            precision=precision)

    @pl.when(hstep == pl.num_programs(1) - 1)
    def _():
        y = acc_ref[...] + b2_ref[...].astype(jnp.float32)   # (tm, D) + (1, D)
        o_ref[...] = y.astype(o_ref.dtype)


def mlp_forward(x, w_fc, b_fc, w_proj, b_proj, *, tm=256, th=512,
                precision=None):
    """x: (M, D) with M = B*T.  w_fc: (D, 4D), w_proj: (4D, D)."""
    M, D = x.shape
    H = w_fc.shape[1]
    assert w_fc.shape == (D, H)
    assert w_proj.shape == (H, D)
    assert b_fc.shape == (H,) and b_proj.shape == (D,)

    tm = min(tm, M)
    th = min(th, H)
    assert M % tm == 0, (M, tm)
    assert H % th == 0, (H, th)

    b_fc2 = b_fc.reshape(1, H)
    b_proj2 = b_proj.reshape(1, D)

    grid_m = M // tm
    grid_h = H // th

    kernel = functools.partial(mlp_kernel, precision=precision)

    # Advisory cost hint for XLA scheduling around the custom call.
    cost = pl.CostEstimate(
        flops=4 * M * D * H,                 # two (M,D,H) matmuls
        transcendentals=M * H,               # erf on the hidden activations
        bytes_accessed=(x.size * x.dtype.itemsize
                        + M * D * x.dtype.itemsize
                        + grid_m * (w_fc.size * w_fc.dtype.itemsize
                                    + w_proj.size * w_proj.dtype.itemsize
                                    + b_fc2.size * b_fc2.dtype.itemsize
                                    + b_proj2.size * b_proj2.dtype.itemsize)),
    )

    return pl.pallas_call(
        kernel,
        out_shape=jax.ShapeDtypeStruct((M, D), x.dtype),
        grid_spec=pltpu.PrefetchScalarGridSpec(
            num_scalar_prefetch=0,
            grid=(grid_m, grid_h),
            in_specs=[
                pl.BlockSpec((tm, D), lambda i, h: (i, 0)),   # x tile (h-invariant)
                pl.BlockSpec((D, th), lambda i, h: (0, h)),   # c_fc weight chunk
                pl.BlockSpec((1, th), lambda i, h: (0, h)),   # c_fc bias chunk
                pl.BlockSpec((th, D), lambda i, h: (h, 0)),   # c_proj weight chunk
                pl.BlockSpec((1, D), lambda i, h: (0, 0)),    # c_proj bias (invariant)
            ],
            out_specs=pl.BlockSpec((tm, D), lambda i, h: (i, 0)),
            scratch_shapes=[pltpu.VMEM((tm, D), jnp.float32)],
        ),
        compiler_params=pltpu.CompilerParams(
            dimension_semantics=("parallel", "arbitrary")),
        cost_estimate=cost,
    )(x, w_fc, b_fc2, w_proj, b_proj2)


def reference_mlp(x, w_fc, b_fc, w_proj, b_proj, precision=None):
    h = jnp.dot(x, w_fc, precision=precision) + b_fc
    h = 0.5 * h * (1.0 + lax.erf(h * (1.0 / math.sqrt(2.0))))
    return jnp.dot(h, w_proj, precision=precision) + b_proj


if __name__ == "__main__":
    # Small GPT-ish config: batch=2, seq=32, n_embd=64 -> hidden=256, dropout=0.
    # tm=32 / th=128 exercise both grid axes (2 token tiles x 2 hidden chunks).
    B, T, D = 2, 32, 64
    H = 4 * D

    key = jax.random.PRNGKey(0)
    kx, k1, k2, k3, k4 = jax.random.split(key, 5)

    x = jax.random.normal(kx, (B, T, D), dtype=jnp.float32)

    # Deterministic init mimicking nn.Linear's U(-1/sqrt(fan_in), 1/sqrt(fan_in)).
    w_fc = jax.random.uniform(k1, (D, H), jnp.float32,
                              -1.0 / math.sqrt(D), 1.0 / math.sqrt(D))
    b_fc = jax.random.uniform(k2, (H,), jnp.float32,
                              -1.0 / math.sqrt(D), 1.0 / math.sqrt(D))
    w_proj = jax.random.uniform(k3, (H, D), jnp.float32,
                                -1.0 / math.sqrt(H), 1.0 / math.sqrt(H))
    b_proj = jax.random.uniform(k4, (D,), jnp.float32,
                                -1.0 / math.sqrt(H), 1.0 / math.sqrt(H))

    x2d = x.reshape(B * T, D)

    # f32 check (HIGHEST precision in both kernel and reference -> tight match,
    # independent of the kernel's chunked accumulation order).
    out = mlp_forward(x2d, w_fc, b_fc, w_proj, b_proj, tm=32, th=128,
                      precision=lax.Precision.HIGHEST)
    out = jax.block_until_ready(out).reshape(B, T, D)
    ref = reference_mlp(x2d, w_fc, b_fc, w_proj, b_proj,
                        precision=lax.Precision.HIGHEST).reshape(B, T, D)
    assert out.shape == (B, T, D)
    assert jnp.allclose(out, ref, atol=1e-4, rtol=1e-4), \
        float(jnp.max(jnp.abs(out - ref)))

    # bf16 path (native MXU dtype, f32 accumulation) — loose tolerance vs f32 ref.
    xb = x2d.astype(jnp.bfloat16)
    out_bf16 = mlp_forward(xb,
                           w_fc.astype(jnp.bfloat16), b_fc.astype(jnp.bfloat16),
                           w_proj.astype(jnp.bfloat16), b_proj.astype(jnp.bfloat16),
                           tm=32, th=128)
    out_bf16 = jax.block_until_ready(out_bf16).astype(jnp.float32).reshape(B, T, D)
    assert jnp.allclose(out_bf16, ref, atol=5e-2, rtol=5e-2), \
        float(jnp.max(jnp.abs(out_bf16 - ref)))

    print("KERNEL_OK")
</pallas_src>

<mosaic_0001>
module attributes {stable_mosaic.version = 11 : i64} {
  func.func @mlp_kernel(%arg0: i32, %arg1: i32, %arg2: memref<32x64xf32, #tpu.memory_space<vmem>>, %arg3: memref<64x128xf32, #tpu.memory_space<vmem>>, %arg4: memref<1x128xf32, #tpu.memory_space<vmem>>, %arg5: memref<128x64xf32, #tpu.memory_space<vmem>>, %arg6: memref<1x64xf32, #tpu.memory_space<vmem>>, %arg7: memref<32x64xf32, #tpu.memory_space<vmem>>, %arg8: memref<32x64xf32, #tpu.memory_space<vmem>>) attributes {dimension_semantics = [#tpu.dimension_semantics<parallel>, #tpu.dimension_semantics<arbitrary>], iteration_bounds = array<i64: 2, 2>, scalar_prefetch = 0 : i64, scratch_operands = 1 : i64, tpu.core_type = #tpu.core_type<tc>, window_params = [{transform_indices = @transform_0, window_bounds = array<i64: 32, 64>}, {transform_indices = @transform_1, window_bounds = array<i64: 64, 128>}, {transform_indices = @transform_2, window_bounds = array<i64: 1, 128>}, {transform_indices = @transform_3, window_bounds = array<i64: 128, 64>}, {pipeline_mode = #tpu.pipeline_mode<synchronous>, transform_indices = @transform_4, window_bounds = array<i64: 1, 64>}, {transform_indices = @transform_5, window_bounds = array<i64: 32, 64>}]} {
    %c0_i32 = arith.constant 0 : i32
    %0 = arith.cmpi eq, %arg1, %c0_i32 : i32
    %1 = arith.extui %0 : i1 to i32
    %c0_i32_0 = arith.constant 0 : i32
    %2 = arith.cmpi ne, %1, %c0_i32_0 : i32
    scf.if %2 {
      %cst_17 = arith.constant 0.000000e+00 : f32
      %25 = vector.broadcast %cst_17 : f32 to vector<32x64xf32>
      %c0_18 = arith.constant 0 : index
      %c0_19 = arith.constant 0 : index
      %26 = vector.load %arg8[%c0_18, %c0_19] : memref<32x64xf32, #tpu.memory_space<vmem>>, vector<32x64xf32>
      tpu.vector_store %arg8[%c0_18, %c0_19], %25 {strides = array<i32>} : memref<32x64xf32, #tpu.memory_space<vmem>>, vector<32x64xf32>,
    } else {
    }
    %c0 = arith.constant 0 : index
    %c0_1 = arith.constant 0 : index
    %3 = vector.load %arg2[%c0, %c0_1] : memref<32x64xf32, #tpu.memory_space<vmem>>, vector<32x64xf32>
    %c0_2 = arith.constant 0 : index
    %c0_3 = arith.constant 0 : index
    %4 = vector.load %arg3[%c0_2, %c0_3] : memref<64x128xf32, #tpu.memory_space<vmem>>, vector<64x128xf32>
    %cst = arith.constant dense<0.000000e+00> : vector<32x128xf32>
    %5 = tpu.matmul %3, %4, %cst {dimension_numbers = #tpu.dot_dimension_numbers<[1], [0], [0], [1], [0, 0, 1, 1], [], []>, precision = #tpu.contract_precision<fp32>} : vector<32x64xf32>, vector<64x128xf32>, vector<32x128xf32> -> vector<32x128xf32>
    %c0_4 = arith.constant 0 : index
    %c0_5 = arith.constant 0 : index
    %6 = vector.load %arg4[%c0_4, %c0_5] : memref<1x128xf32, #tpu.memory_space<vmem>>, vector<1x128xf32>
    %7 = vector.broadcast %6 : vector<1x128xf32> to vector<32x128xf32>
    %8 = arith.addf %5, %7 : vector<32x128xf32>
    %cst_6 = arith.constant 5.000000e-01 : f32
    %9 = vector.broadcast %cst_6 : f32 to vector<32x128xf32>
    %10 = arith.mulf %9, %8 : vector<32x128xf32>
    %cst_7 = arith.constant 0.707106769 : f32
    %11 = vector.broadcast %cst_7 : f32 to vector<32x128xf32>
    %12 = arith.mulf %8, %11 : vector<32x128xf32>
    %13 = math.erf %12 : vector<32x128xf32>
    %cst_8 = arith.constant 1.000000e+00 : f32
    %14 = vector.broadcast %cst_8 : f32 to vector<32x128xf32>
    %15 = arith.addf %14, %13 : vector<32x128xf32>
    %16 = arith.mulf %10, %15 : vector<32x128xf32>
    %c0_9 = arith.constant 0 : index
    %c0_10 = arith.constant 0 : index
    %17 = vector.load %arg8[%c0_9, %c0_10] : memref<32x64xf32, #tpu.memory_space<vmem>>, vector<32x64xf32>
    %c0_11 = arith.constant 0 : index
    %c0_12 = arith.constant 0 : index
    %18 = vector.load %arg5[%c0_11, %c0_12] : memref<128x64xf32, #tpu.memory_space<vmem>>, vector<128x64xf32>
    %cst_13 = arith.constant dense<0.000000e+00> : vector<32x64xf32>
    %19 = tpu.matmul %16, %18, %cst_13 {dimension_numbers = #tpu.dot_dimension_numbers<[1], [0], [0], [1], [0, 0, 1, 1], [], []>, precision = #tpu.contract_precision<fp32>} : vector<32x128xf32>, vector<128x64xf32>, vector<32x64xf32> -> vector<32x64xf32>
    %20 = arith.addf %17, %19 : vector<32x64xf32>
    %c0_14 = arith.constant 0 : index
    %c0_15 = arith.constant 0 : index
    %21 = vector.load %arg8[%c0_14, %c0_15] : memref<32x64xf32, #tpu.memory_space<vmem>>, vector<32x64xf32>
    tpu.vector_store %arg8[%c0_14, %c0_15], %20 {strides = array<i32>} : memref<32x64xf32, #tpu.memory_space<vmem>>, vector<32x64xf32>,
    %c1_i32 = arith.constant 1 : i32
    %22 = arith.cmpi eq, %arg1, %c1_i32 : i32
    %23 = arith.extui %22 : i1 to i32
    %c0_i32_16 = arith.constant 0 : i32
    %24 = arith.cmpi ne, %23, %c0_i32_16 : i32
    scf.if %24 {
      %c0_17 = arith.constant 0 : index
      %c0_18 = arith.constant 0 : index
      %25 = vector.load %arg8[%c0_17, %c0_18] : memref<32x64xf32, #tpu.memory_space<vmem>>, vector<32x64xf32>
      %c0_19 = arith.constant 0 : index
      %c0_20 = arith.constant 0 : index
      %26 = vector.load %arg6[%c0_19, %c0_20] : memref<1x64xf32, #tpu.memory_space<vmem>>, vector<1x64xf32>
      %27 = vector.broadcast %26 : vector<1x64xf32> to vector<32x64xf32>
      %28 = arith.addf %25, %27 : vector<32x64xf32>
      %c0_21 = arith.constant 0 : index
      %c0_22 = arith.constant 0 : index
      %29 = vector.load %arg7[%c0_21, %c0_22] : memref<32x64xf32, #tpu.memory_space<vmem>>, vector<32x64xf32>
      tpu.vector_store %arg7[%c0_21, %c0_22], %28 {strides = array<i32>} : memref<32x64xf32, #tpu.memory_space<vmem>>, vector<32x64xf32>,
    } else {
    }
    return
  }
  func.func @transform_0(%arg0: i32, %arg1: i32) -> (i32, i32) {
    %c0_i32 = arith.constant 0 : i32
    %c0_i32_0 = arith.constant 0 : i32
    return %arg0, %c0_i32 : i32, i32
  }
  func.func @transform_1(%arg0: i32, %arg1: i32) -> (i32, i32) {
    %c0_i32 = arith.constant 0 : i32
    %c0_i32_0 = arith.constant 0 : i32
    return %c0_i32, %arg1 : i32, i32
  }
  func.func @transform_2(%arg0: i32, %arg1: i32) -> (i32, i32) {
    %c0_i32 = arith.constant 0 : i32
    %c0_i32_0 = arith.constant 0 : i32
    return %c0_i32, %arg1 : i32, i32
  }
  func.func @transform_3(%arg0: i32, %arg1: i32) -> (i32, i32) {
    %c0_i32 = arith.constant 0 : i32
    %c0_i32_0 = arith.constant 0 : i32
    return %arg1, %c0_i32 : i32, i32
  }
  func.func @transform_4(%arg0: i32, %arg1: i32) -> (i32, i32) {
    %c0_i32 = arith.constant 0 : i32
    %c0_i32_0 = arith.constant 0 : i32
    %c0_i32_1 = arith.constant 0 : i32
    return %c0_i32, %c0_i32_0 : i32, i32
  }
  func.func @transform_5(%arg0: i32, %arg1: i32) -> (i32, i32) {
    %c0_i32 = arith.constant 0 : i32
    %c0_i32_0 = arith.constant 0 : i32
    return %arg0, %c0_i32 : i32, i32
  }
}

</mosaic_0001>

<llo_original>
// kernel: tpu_custom_call.1
$region0: #{tpu_custom_call.1}
  #allocation0 [shape = 'u32[]', space=smem, size = 0x4, offset = 0x4, fixed_abs, tag = 'smem constant byte address 0x4 - core index']
  #allocation1 [shape = 'u32[72,128]{1,0:T(1,128)}', space=vmem, size = 0x9000, scoped, tag = 'internal scratch']
  #allocation2 [shape = 'f32[32,64]{1,0:T(8,128)}', space=vmem, size = 0x4000, scoped, tag = 'scratch operand']
  %s0 = inlined_call_operand.vmem [shape: f32[64,64], index: 0, kind: input, shape index: {}]
  %s1 = inlined_call_operand.vmem [shape: f32[64,256], index: 1, kind: input, shape index: {}]
  %s2 = inlined_call_operand.vmem [shape: f32[1,256], index: 2, kind: input, shape index: {}]
  %s3 = inlined_call_operand.vmem [shape: f32[256,64], index: 3, kind: input, shape index: {}]
  %s4 = inlined_call_operand.vmem [shape: f32[1,64], index: 4, kind: input, shape index: {}]
  %s5 = inlined_call_operand.hbm [shape: f32[64,64], index: 5, kind: output, shape index: {}]
  %s6 = sld [smem:[#allocation0]]
  $region99: #{tpu_custom_call.1} parent=0
    _
  %s8 = ssub.s32 1, %s6
  %s9 = scalar_select 0, %s8, %s6
  $region1: #{tpu_custom_call.1} parent=0
    #allocation3 [shape = 'u8[65536]{0}', space=vmem, size = 0x10000, scoped, tag = 'input window, operand 1']
    #allocation4 [shape = 'u8[32768]{0}', space=vmem, size = 0x8000, scoped, tag = 'output window, operand 0']
    #allocation5 [shape = 's32[2]{0}', space=sflag, size = 0x8, scoped, tag = 'scoped memory for tpu_custom_call.1']
    %10 = vsyncpa [#allocation5], 0
    %s11 = scalar_lea.sflag [#allocation5], 1
    %12 = vsyncpa %s11, 0
    loop: start=0, step=1, limit=6
    $region2: #{tpu_custom_call.1} parent=1 // loop_pre_header
      _
    $region3: #{tpu_custom_call.1} parent=1 // loop_header
      %s14 = sphi 0, %s18
      %p15 = scmp.ge.s32.totalorder %s14, 6
      %s21 = sphi 0, %s33
      %s22 = sphi 0, %s29
      %s23 = sphi 0, %s21
      %s24 = sphi 0, %s22
      %s25 = sphi 0, %s23
      %s26 = sphi 0, %s24
      %s36 = sphi 0, %s38
      %s39 = sphi 0, %s36
      %s40 = sphi 0, %s39
      %s56 = sphi 0, %s40
      %s62 = sphi 0, %s64
      %s65 = sphi 0, %s62
      %s66 = sphi 0, %s65
      %s82 = sphi 0, %s66
      %s88 = sphi 0, %s90
      %s91 = sphi 0, %s88
      %s92 = sphi 0, %s91
      %s108 = sphi 0, %s92
      %s114 = sphi 0, %s116
      %s117 = sphi 0, %s114
      %s118 = sphi 0, %s117
      %s134 = sphi 0, %s118
      %s138 = sphi 0, %s138
      %s140 = sphi 0, %s138
      %s141 = sphi 0, %s140
      %s155 = sphi 0, %s141
      %s161 = sphi 0, %s163
      %s164 = sphi 0, %s161
      %s165 = sphi 0, %s164
      %s181 = sphi 0, %s165
    $region4: #{tpu_custom_call.1} parent=1 // loop_header_branch
      %17 = sbr.rel (%p15) target = $region8
    $region5: #{tpu_custom_call.1} parent=1 // loop_body
      %s19 = ssub.s32 %s14, 1
      %s20 = ssub.s32 %s14, 2
      %s27 = sadd.s32 1, %s22
      %p28 = scmp.ge.s32.totalorder %s27, 2
      %s29 = scalar_select %p28, 0, %s27
      %s30 = sadd.s32 1, %s21
      %s31 = scalar_select %p28, %s30, %s21
      %p32 = scmp.ge.s32.totalorder %s31, 2
      %s33 = scalar_select %p32, 0, %s31
      %s34 = ssub.s32 %s21, %s33
      %p35 = scmp.eq.s32.totalorder %s34, 0
      %s37 = sadd.s32 %s36, 1
      %s38 = scalar_select %p35, %s36, %s37
      %p41 = pneg %p35
      %p42 = scmp.eq.s32.totalorder %s14, 3
      %p43 = por %p41, %p42
      %p44 = scmp.ne.s32.totalorder %s36, %s39
      %p45 = scmp.eq.s32.totalorder %s14, 0
      %p46 = por %p44, %p45
      %p47 = scmp.ne.s32.totalorder %s36, %s39
      %p48 = scmp.eq.s32.totalorder %s19, 3
      %p49 = por %p47, %p48
      %p50 = scmp.ne.s32.totalorder %s39, %s40
      %p51 = scmp.eq.s32.totalorder %s19, 0
      %p52 = por %p50, %p51
      %p53 = scmp.ne.s32.totalorder %s39, %s40
      %p54 = scmp.eq.s32.totalorder %s20, 3
      %p55 = por %p53, %p54
      %p57 = scmp.ne.s32.totalorder %s40, %s56
      %p58 = scmp.eq.s32.totalorder %s20, 0
      %p59 = por %p57, %p58
      %s60 = ssub.s32 %s22, %s29
      %p61 = scmp.eq.s32.totalorder %s60, 0
      %s63 = sadd.s32 %s62, 1
      %s64 = scalar_select %p61, %s62, %s63
      %p67 = pneg %p61
      %p68 = scmp.eq.s32.totalorder %s14, 3
      %p69 = por %p67, %p68
      %p70 = scmp.ne.s32.totalorder %s62, %s65
      %p71 = scmp.eq.s32.totalorder %s14, 0
      %p72 = por %p70, %p71
      %p73 = scmp.ne.s32.totalorder %s62, %s65
      %p74 = scmp.eq.s32.totalorder %s19, 3
      %p75 = por %p73, %p74
      %p76 = scmp.ne.s32.totalorder %s65, %s66
      %p77 = scmp.eq.s32.totalorder %s19, 0
      %p78 = por %p76, %p77
      %p79 = scmp.ne.s32.totalorder %s65, %s66
      %p80 = scmp.eq.s32.totalorder %s20, 3
      %p81 = por %p79, %p80
      %p83 = scmp.ne.s32.totalorder %s66, %s82
      %p84 = scmp.eq.s32.totalorder %s20, 0
      %p85 = por %p83, %p84
      %s86 = ssub.s32 %s22, %s29
      %p87 = scmp.eq.s32.totalorder %s86, 0
      %s89 = sadd.s32 %s88, 1
      %s90 = scalar_select %p87, %s88, %s89
      %p93 = pneg %p87
      %p94 = scmp.eq.s32.totalorder %s14, 3
      %p95 = por %p93, %p94
      %p96 = scmp.ne.s32.totalorder %s88, %s91
      %p97 = scmp.eq.s32.totalorder %s14, 0
      %p98 = por %p96, %p97
      %p99 = scmp.ne.s32.totalorder %s88, %s91
      %p100 = scmp.eq.s32.totalorder %s19, 3
      %p101 = por %p99, %p100
      %p102 = scmp.ne.s32.totalorder %s91, %s92
      %p103 = scmp.eq.s32.totalorder %s19, 0
      %p104 = por %p102, %p103
      %p105 = scmp.ne.s32.totalorder %s91, %s92
      %p106 = scmp.eq.s32.totalorder %s20, 3
      %p107 = por %p105, %p106
      %p109 = scmp.ne.s32.totalorder %s92, %s108
      %p110 = scmp.eq.s32.totalorder %s20, 0
      %p111 = por %p109, %p110
      %s112 = ssub.s32 %s22, %s29
      %p113 = scmp.eq.s32.totalorder %s112, 0
      %s115 = sadd.s32 %s114, 1
      %s116 = scalar_select %p113, %s114, %s115
      %p119 = pneg %p113
      %p120 = scmp.eq.s32.totalorder %s14, 3
      %p121 = por %p119, %p120
      %p122 = scmp.ne.s32.totalorder %s114, %s117
      %p123 = scmp.eq.s32.totalorder %s14, 0
      %p124 = por %p122, %p123
      %p125 = scmp.ne.s32.totalorder %s114, %s117
      %p126 = scmp.eq.s32.totalorder %s19, 3
      %p127 = por %p125, %p126
      %p128 = scmp.ne.s32.totalorder %s117, %s118
      %p129 = scmp.eq.s32.totalorder %s19, 0
      %p130 = por %p128, %p129
      %p131 = scmp.ne.s32.totalorder %s117, %s118
      %p132 = scmp.eq.s32.totalorder %s20, 3
      %p133 = por %p131, %p132
      %p135 = scmp.ne.s32.totalorder %s118, %s134
      %p136 = scmp.eq.s32.totalorder %s20, 0
      %p137 = por %p135, %p136
      %s139 = sadd.s32 %s138, 1
      %p142 = scmp.eq.s32.totalorder %s14, 3
      %p143 = scmp.ne.s32.totalorder %s138, %s140
      %p144 = scmp.eq.s32.totalorder %s14, 0
      %p145 = por %p143, %p144
      %p146 = scmp.ne.s32.totalorder %s138, %s140
      %p147 = scmp.eq.s32.totalorder %s19, 3
      %p148 = por %p146, %p147
      %p149 = scmp.ne.s32.totalorder %s140, %s141
      %p150 = scmp.eq.s32.totalorder %s19, 0
      %p151 = por %p149, %p150
      %p152 = scmp.ne.s32.totalorder %s140, %s141
      %p153 = scmp.eq.s32.totalorder %s20, 3
      %p154 = por %p152, %p153
      %p156 = scmp.ne.s32.totalorder %s141, %s155
      %p157 = scmp.eq.s32.totalorder %s20, 0
      %p158 = por %p156, %p157
      %s159 = ssub.s32 %s21, %s33
      %p160 = scmp.eq.s32.totalorder %s159, 0
      %s162 = sadd.s32 %s161, 1
      %s163 = scalar_select %p160, %s161, %s162
      %p166 = pneg %p160
      %p167 = scmp.eq.s32.totalorder %s14, 3
      %p168 = por %p166, %p167
      %p169 = scmp.ne.s32.totalorder %s161, %s164
      %p170 = scmp.eq.s32.totalorder %s14, 0
      %p171 = por %p169, %p170
      %p172 = scmp.ne.s32.totalorder %s161, %s164
      %p173 = scmp.eq.s32.totalorder %s19, 3
      %p174 = por %p172, %p173
      %p175 = scmp.ne.s32.totalorder %s164, %s165
      %p176 = scmp.eq.s32.totalorder %s19, 0
      %p177 = por %p175, %p176
      %p178 = scmp.ne.s32.totalorder %s164, %s165
      %p179 = scmp.eq.s32.totalorder %s20, 3
      %p180 = por %p178, %p179
      %p182 = scmp.ne.s32.totalorder %s165, %s181
      %p183 = scmp.eq.s32.totalorder %s20, 0
      %p184 = por %p182, %p183
      %p185 = scmp.le.s32.totalorder 1, %s14
      %p186 = scmp.lt.s32.totalorder %s14, 5
      %p187 = pnand %p185, %p186
      %p188 = pneg %p187
      // Predicated region
      $region9: #{tpu_custom_call.1} parent=5 // pred_check
        _
      $region10: #{tpu_custom_call.1} parent=5 // pred_check_branch
        %190 = sbr.rel (%p187) target = $region12
      $region11: #{tpu_custom_call.1} parent=5 // pred_region
        %s191 = ssub.s32 %s14, 1
        // Predicated region
        $region13: #{tpu_custom_call.1} parent=11 // pred_check
          %p192 = pneg %p151
        $region14: #{tpu_custom_call.1} parent=11 // pred_check_branch
          %194 = sbr.rel (%p192) target = $region16
        $region15: #{tpu_custom_call.1} parent=11 // pred_region
          _
        $region16: #{tpu_custom_call.1} parent=11 // pred_fallthru
          _
      $region12: #{tpu_custom_call.1} parent=5 // pred_fallthru
        _
      %p195 = scmp.lt.s32.totalorder %s14, 4
      // Predicated region
      $region17: #{tpu_custom_call.1} parent=5 // pred_check
        %p196 = pneg %p195
      $region18: #{tpu_custom_call.1} parent=5 // pred_check_branch
        %198 = sbr.rel (%p196) target = $region20
      $region19: #{tpu_custom_call.1} parent=5 // pred_region
        // Predicated region
        $region21: #{tpu_custom_call.1} parent=19 // pred_check
          %p199 = pneg %p46
        $region22: #{tpu_custom_call.1} parent=19 // pred_check_branch
          %201 = sbr.rel (%p199) target = $region24
        $region23: #{tpu_custom_call.1} parent=19 // pred_region
          %s202 = smul.u32 4, %s21
          %p203 = scmp.lt.s32.totalorder %s202, 7
          %s204 = scalar_select %p203, %s202, 7
          %s205 = smul.addr %s204, 8
          %s206 = scalar_lea.vmem %s0, %s205
          %s207 = smul.u32 4, %s21
        $region24: #{tpu_custom_call.1} parent=19 // pred_fallthru
          _
        // Predicated region
        $region25: #{tpu_custom_call.1} parent=19 // pred_check
          %p208 = pneg %p72
        $region26: #{tpu_custom_call.1} parent=19 // pred_check_branch
          %210 = sbr.rel (%p208) target = $region28
        $region27: #{tpu_custom_call.1} parent=19 // pred_region
          %s211 = sand.u32 %s62, 1
          %s212 = sand.u32 %s62, 1
          %s213 = smul.addr %s212, 64
          %s214 = scalar_lea.vmem [#allocation3], %s213
          %s215 = smul.addr %s22, 8
          %s216 = scalar_lea.vmem %s1, %s215
          // Predicated region
          $region29: #{tpu_custom_call.1} parent=27 // pred_check
            _
          $region30: #{tpu_custom_call.1} parent=27 // pred_check_branch
            %218 = sbr.rel (0) target = $region32
          $region31: #{tpu_custom_call.1} parent=27 // pred_region
            // Predicated region
            $region33: #{tpu_custom_call.1} parent=31 // pred_check
              _
            $region34: #{tpu_custom_call.1} parent=31 // pred_check_branch
              %220 = sbr.rel (0) target = $region36
            $region35: #{tpu_custom_call.1} parent=31 // pred_region
              // Predicated region
              $region48: #{tpu_custom_call.1} parent=35 // pred_check
                _
              $region49: #{tpu_custom_call.1} parent=35 // pred_check_branch
                %250 = sbr.rel (0) target = $region51
              $region50: #{tpu_custom_call.1} parent=35 // pred_region
                loop: start=0, step=1, limit=1
                $region52: #{tpu_custom_call.1} parent=50 // loop_pre_header
                  _
                $region53: #{tpu_custom_call.1} parent=50 // loop_header
                  %s252 = sphi 0, %s256
                  %p253 = scmp.ge.s32.totalorder %s252, 1
                  %s257 = sphi %s216, %s216
                  %s258 = sphi %s214, %s214
                $region54: #{tpu_custom_call.1} parent=50 // loop_header_branch
                  %255 = sbr.rel (%p253) target = $region58
                $region55: #{tpu_custom_call.1} parent=50 // loop_body
                  %v259 = vld [vmem:[%s257] sm:$0xff]
                  %260 = vst [vmem:[%s258] sm:$0xff] %v259
                  %v261 = vld [vmem:[%s257 + $0x10] sm:$0xff]
                  %262 = vst [vmem:[%s258 + $0x8] sm:$0xff] %v261
                  %v263 = vld [vmem:[%s257 + $0x20] sm:$0xff]
                  %264 = vst [vmem:[%s258 + $0x10] sm:$0xff] %v263
                  %v265 = vld [vmem:[%s257 + $0x30] sm:$0xff]
                  %266 = vst [vmem:[%s258 + $0x18] sm:$0xff] %v265
                  %v267 = vld [vmem:[%s257 + $0x40] sm:$0xff]
                  %268 = vst [vmem:[%s258 + $0x20] sm:$0xff] %v267
                  %v269 = vld [vmem:[%s257 + $0x50] sm:$0xff]
                  %270 = vst [vmem:[%s258 + $0x28] sm:$0xff] %v269
                  %v271 = vld [vmem:[%s257 + $0x60] sm:$0xff]
                  %272 = vst [vmem:[%s258 + $0x30] sm:$0xff] %v271
                  %v273 = vld [vmem:[%s257 + $0x70] sm:$0xff]
                  %274 = vst [vmem:[%s258 + $0x38] sm:$0xff] %v273
                $region56: #{tpu_custom_call.1} parent=50 // loop_footer
                  %s256 = sadd.s32 1, %s252
                $region57: #{tpu_custom_call.1} parent=50 // loop_footer_branch
                  %251 = sbr.rel target = $region53
                $region58: #{tpu_custom_call.1} parent=50 // loop_exit
                  _
              $region51: #{tpu_custom_call.1} parent=35 // pred_fallthru
                _
              // Predicated region
              $region59: #{tpu_custom_call.1} parent=35 // pred_check
                _
              $region60: #{tpu_custom_call.1} parent=35 // pred_check_branch
                %276 = sbr.rel target = $region62
              $region61: #{tpu_custom_call.1} parent=35 // pred_region
                _
              $region62: #{tpu_custom_call.1} parent=35 // pred_fallthru
                _
            $region36: #{tpu_custom_call.1} parent=31 // pred_fallthru
              _
            // Predicated region
            $region37: #{tpu_custom_call.1} parent=31 // pred_check
              _
            $region38: #{tpu_custom_call.1} parent=31 // pred_check_branch
              %222 = sbr.rel target = $region40
            $region39: #{tpu_custom_call.1} parent=31 // pred_region
              %s224 = ssub.s32 256, 1
              loop: start=0, step=1, limit=1
              $region41: #{tpu_custom_call.1} parent=39 // loop_pre_header
                _
              $region42: #{tpu_custom_call.1} parent=39 // loop_header
                %s226 = sphi 0, %s230
                %p227 = scmp.ge.s32.totalorder %s226, 1
                %s231 = sphi %s216, %s216
                %s232 = sphi %s214, %s214
              $region43: #{tpu_custom_call.1} parent=39 // loop_header_branch
                %229 = sbr.rel (%p227) target = $region47
              $region44: #{tpu_custom_call.1} parent=39 // loop_body
                %v233 = vld [vmem:[%s231] sm:%s224]
                %234 = vst [vmem:[%s232] sm:%s224] %v233
                %v235 = vld [vmem:[%s231 + $0x10] sm:%s224]
                %236 = vst [vmem:[%s232 + $0x8] sm:%s224] %v235
                %v237 = vld [vmem:[%s231 + $0x20] sm:%s224]
                %238 = vst [vmem:[%s232 + $0x10] sm:%s224] %v237
                %v239 = vld [vmem:[%s231 + $0x30] sm:%s224]
                %240 = vst [vmem:[%s232 + $0x18] sm:%s224] %v239
                %v241 = vld [vmem:[%s231 + $0x40] sm:%s224]
                %242 = vst [vmem:[%s232 + $0x20] sm:%s224] %v241
                %v243 = vld [vmem:[%s231 + $0x50] sm:%s224]
                %244 = vst [vmem:[%s232 + $0x28] sm:%s224] %v243
                %v245 = vld [vmem:[%s231 + $0x60] sm:%s224]
                %246 = vst [vmem:[%s232 + $0x30] sm:%s224] %v245
                %v247 = vld [vmem:[%s231 + $0x70] sm:%s224]
                %248 = vst [vmem:[%s232 + $0x38] sm:%s224] %v247
              $region45: #{tpu_custom_call.1} parent=39 // loop_footer
                %s230 = sadd.s32 1, %s226
              $region46: #{tpu_custom_call.1} parent=39 // loop_footer_branch
                %225 = sbr.rel target = $region42
              $region47: #{tpu_custom_call.1} parent=39 // loop_exit
                _
            $region40: #{tpu_custom_call.1} parent=31 // pred_fallthru
              _
          $region32: #{tpu_custom_call.1} parent=27 // pred_fallthru
            _
          %277 = vnop
        $region28: #{tpu_custom_call.1} parent=19 // pred_fallthru
          _
        // Predicated region
        $region63: #{tpu_custom_call.1} parent=19 // pred_check
          %p278 = pneg %p98
        $region64: #{tpu_custom_call.1} parent=19 // pred_check_branch
          %280 = sbr.rel (%p278) target = $region66
        $region65: #{tpu_custom_call.1} parent=19 // pred_region
          %p281 = scmp.lt.s32.totalorder %s22, 1
          %s282 = scalar_select %p281, %s22, 1
          %s283 = scalar_lea.vmem %s2, %s282
        $region66: #{tpu_custom_call.1} parent=19 // pred_fallthru
          _
        // Predicated region
        $region67: #{tpu_custom_call.1} parent=19 // pred_check
          %p284 = pneg %p124
        $region68: #{tpu_custom_call.1} parent=19 // pred_check_branch
          %286 = sbr.rel (%p284) target = $region70
        $region69: #{tpu_custom_call.1} parent=19 // pred_region
          %s287 = smul.u32 16, %s22
          %p288 = scmp.lt.s32.totalorder %s287, 31
          %s289 = scalar_select %p288, %s287, 31
          %s290 = smul.addr %s289, 8
          %s291 = scalar_lea.vmem %s3, %s290
          %s292 = smul.u32 16, %s22
        $region70: #{tpu_custom_call.1} parent=19 // pred_fallthru
          _
      $region20: #{tpu_custom_call.1} parent=5 // pred_fallthru
        _
      %p293 = scmp.le.s32.totalorder 1, %s14
      %p294 = scmp.lt.s32.totalorder %s14, 5
      %p295 = pnand %p293, %p294
      %p296 = pneg %p295
      // Predicated region
      $region71: #{tpu_custom_call.1} parent=5 // pred_check
        _
      $region72: #{tpu_custom_call.1} parent=5 // pred_check_branch
        %298 = sbr.rel (%p295) target = $region74
      $region73: #{tpu_custom_call.1} parent=5 // pred_region
        %s299 = ssub.s32 %s14, 1
        %s300 = sand.u32 %s65, 1
        %s301 = sand.u32 %s65, 1
        %s302 = smul.addr %s301, 64
        %s303 = scalar_lea.vmem [#allocation3], %s302
        // Predicated region
        $region75: #{tpu_custom_call.1} parent=73 // pred_check
          %p304 = pneg %p78
        $region76: #{tpu_custom_call.1} parent=73 // pred_check_branch
          %306 = sbr.rel (%p304) target = $region78
        $region77: #{tpu_custom_call.1} parent=73 // pred_region
          _
        $region78: #{tpu_custom_call.1} parent=73 // pred_fallthru
          _
        %s307 = smul.u32 4, %s23
        %p308 = scmp.lt.s32.totalorder %s307, 7
        %s309 = scalar_select %p308, %s307, 7
        %s310 = smul.addr %s309, 8
        %s311 = scalar_lea.vmem %s0, %s310
        %p312 = pneg %p52
        %p313 = pneg %p49
        %s314 = sand.u32 %s65, 1
        %s315 = sand.u32 %s65, 1
        %s316 = smul.addr %s315, 64
        %s317 = scalar_lea.vmem [#allocation3], %s316
        %p318 = pneg %p78
        %p319 = pneg %p75
        %p320 = scmp.lt.s32.totalorder %s24, 1
        %s321 = scalar_select %p320, %s24, 1
        %s322 = scalar_lea.vmem %s2, %s321
        %p323 = pneg %p104
        %p324 = pneg %p101
        %s325 = smul.u32 16, %s24
        %p326 = scmp.lt.s32.totalorder %s325, 31
        %s327 = scalar_select %p326, %s325, 31
        %s328 = smul.addr %s327, 8
        %s329 = scalar_lea.vmem %s3, %s328
        %p330 = pneg %p130
        %p331 = pneg %p127
        %p332 = pneg %p151
        %p333 = pneg %p148
        %p334 = pneg %p177
        %p335 = pneg %p174
        %s336 = sand.u32 %s164, 1
        %s337 = scalar_lea.sflag [#allocation5], %s336
        %s338 = sand.u32 %s164, 1
        %s339 = smul.addr %s338, 32
        %s340 = scalar_lea.vmem [#allocation4], %s339
        %s341 = smul.u32 4, %s23
        %p342 = scmp.lt.s32.totalorder %s341, 7
        %s343 = scalar_select %p342, %s341, 7
        %s344 = smul.addr %s343, 8
        %s345 = scalar_lea.vmem %s0, %s344
        %s346 = smul.u32 4, %s23
        %p347 = scmp.lt.s32.totalorder %s24, 1
        %s348 = scalar_select %p347, %s24, 1
        %s349 = scalar_lea.vmem %s2, %s348
        %s350 = smul.u32 16, %s24
        %p351 = scmp.lt.s32.totalorder %s350, 31
        %s352 = scalar_select %p351, %s350, 31
        %s353 = smul.addr %s352, 8
        %s354 = scalar_lea.vmem %s3, %s353
        %s355 = smul.u32 16, %s24
        %s356 = smul.u32 4, %s23
        %p357 = scmp.eq.s32.totalorder %s24, 0
        // Predicated region
        $region79: #{tpu_custom_call.1} parent=73 // pred_check
          %p358 = pneg %p357
        $region80: #{tpu_custom_call.1} parent=73 // pred_check_branch
          %360 = sbr.rel (%p358) target = $region82
        $region81: #{tpu_custom_call.1} parent=73 // pred_region
          %vm361 = vcmask 523264
          %362 = vst.msk [vmem:[#allocation2] sm:$0xff] %vm361, 0.0
          %363 = vst.msk [vmem:[#allocation2 + $0x8] sm:$0xff] %vm361, 0.0
          %364 = vst.msk [vmem:[#allocation2 + $0x10] sm:$0xff] %vm361, 0.0
          %365 = vst.msk [vmem:[#allocation2 + $0x18] sm:$0xff] %vm361, 0.0
        $region82: #{tpu_custom_call.1} parent=73 // pred_fallthru
          _
        %v366 = vld [vmem:[%s345] sm:$0xff]
        %v367 = vld [vmem:[%s345 + $0x8] sm:$0xff]
        %v368 = vld [vmem:[%s345 + $0x10] sm:$0xff]
        %v369 = vld [vmem:[%s345 + $0x18] sm:$0xff]
        %v370 = vld [vmem:[%s303] sm:$0xff]
        %v371 = vld [vmem:[%s303 + $0x8] sm:$0xff]
        %v372 = vld [vmem:[%s303 + $0x10] sm:$0xff]
        %v373 = vld [vmem:[%s303 + $0x18] sm:$0xff]
        %v374 = vld [vmem:[%s303 + $0x20] sm:$0xff]
        %v375 = vld [vmem:[%s303 + $0x28] sm:$0xff]
        %v376 = vld [vmem:[%s303 + $0x30] sm:$0xff]
        %v377 = vld [vmem:[%s303 + $0x38] sm:$0xff]
        %v378 = vld [vmem:[%s349] sm:$0x1]
        %v380 = vperm.slane %v378, 0
        %vm382 = vcmask 523264
        %v384 = vsel %vm382, %v366, 0
        %v387 = vsel %vm382, %v367, 0
        %v390 = vsel %vm382, %v368, 0
        %v393 = vsel %vm382, %v369, 0
        %395 = vmatpush.msra.mxu0 0.0
        %396 = vmatpush.msra.mxu0 0.0
        %397 = vmatpush.msra.mxu0 0.0
        %398 = vmatpush.msra.mxu0 0.0
        %399 = vmatpush.msra.mxu0 0.0
        %400 = vmatpush.msra.mxu0 0.0
        %401 = vmatpush.msra.mxu0 0.0
        %402 = vmatpush.msra.mxu0 0.0
        %v403 = vand.u32 %v377, 4294901760
        %404 = vmatpush.msra.mxu0 %v403
        %v405 = vand.u32 %v376, 4294901760
        %406 = vmatpush.msra.mxu0 %v405
        %v407 = vand.u32 %v375, 4294901760
        %408 = vmatpush.msra.mxu0 %v407
        %v409 = vand.u32 %v374, 4294901760
        %410 = vmatpush.msra.mxu0 %v409
        %v411 = vand.u32 %v373, 4294901760
        %412 = vmatpush.msra.mxu0 %v411
        %v413 = vand.u32 %v372, 4294901760
        %414 = vmatpush.msra.mxu0 %v413
        %v415 = vand.u32 %v371, 4294901760
        %416 = vmatpush.msra.mxu0 %v415
        %v417 = vand.u32 %v370, 4294901760
        %418 = vmatpush.msra.mxu0 %v417
        %v419 = vand.u32 %v384, 4294901760
        %v420 = vsub.f32 %v384, %v419
        %v421 = vand.u32 %v420, 4294901760
        %v422 = vsub.f32 %v420, %v421
        %v423 = vand.u32 %v422, 4294901760
        %424 = vmatmul.f32.gmra.mxu0 %v423
        %v425 = vpop.f32.mrf.mxu0
        %v426 = vadd.f32 %v380, %v425
        %v427 = vand.u32 %v387, 4294901760
        %v428 = vsub.f32 %v387, %v427
        %v429 = vand.u32 %v428, 4294901760
        %v430 = vsub.f32 %v428, %v429
        %v431 = vand.u32 %v430, 4294901760
        %432 = vmatmul.f32.gmra.mxu0 %v431
        %v433 = vpop.f32.mrf.mxu0
        %v434 = vadd.f32 %v380, %v433
        %v435 = vand.u32 %v390, 4294901760
        %v436 = vsub.f32 %v390, %v435
        %v437 = vand.u32 %v436, 4294901760
        %v438 = vsub.f32 %v436, %v437
        %v439 = vand.u32 %v438, 4294901760
        %440 = vmatmul.f32.gmra.mxu0 %v439
        %v441 = vpop.f32.mrf.mxu0
        %v442 = vadd.f32 %v380, %v441
        %v443 = vand.u32 %v393, 4294901760
        %v444 = vsub.f32 %v393, %v443
        %v445 = vand.u32 %v444, 4294901760
        %v446 = vsub.f32 %v444, %v445
        %v447 = vand.u32 %v446, 4294901760
        %448 = vmatmul.f32.gmra.mxu0 %v447
        %v449 = vpop.f32.mrf.mxu0
        %v450 = vadd.f32 %v380, %v449
        %451 = vdwg.mxu0
        %452 = vmatpush.msra.mxu0 0.0
        %453 = vmatpush.msra.mxu0 0.0
        %454 = vmatpush.msra.mxu0 0.0
        %455 = vmatpush.msra.mxu0 0.0
        %456 = vmatpush.msra.mxu0 0.0
        %457 = vmatpush.msra.mxu0 0.0
        %458 = vmatpush.msra.mxu0 0.0
        %459 = vmatpush.msra.mxu0 0.0
        %v460 = vand.u32 %v377, 4294901760
        %v461 = vsub.f32 %v377, %v460
        %v462 = vand.u32 %v461, 4294901760
        %v463 = vsub.f32 %v461, %v462
        %v464 = vand.u32 %v463, 4294901760
        %465 = vmatpush.msra.mxu0 %v464
        %v466 = vand.u32 %v376, 4294901760
        %v467 = vsub.f32 %v376, %v466
        %v468 = vand.u32 %v467, 4294901760
        %v469 = vsub.f32 %v467, %v468
        %v470 = vand.u32 %v469, 4294901760
        %471 = vmatpush.msra.mxu0 %v470
        %v472 = vand.u32 %v375, 4294901760
        %v473 = vsub.f32 %v375, %v472
        %v474 = vand.u32 %v473, 4294901760
        %v475 = vsub.f32 %v473, %v474
        %v476 = vand.u32 %v475, 4294901760
        %477 = vmatpush.msra.mxu0 %v476
        %v478 = vand.u32 %v374, 4294901760
        %v479 = vsub.f32 %v374, %v478
        %v480 = vand.u32 %v479, 4294901760
        %v481 = vsub.f32 %v479, %v480
        %v482 = vand.u32 %v481, 4294901760
        %483 = vmatpush.msra.mxu0 %v482
        %v484 = vand.u32 %v373, 4294901760
        %v485 = vsub.f32 %v373, %v484
        %v486 = vand.u32 %v485, 4294901760
        %v487 = vsub.f32 %v485, %v486
        %v488 = vand.u32 %v487, 4294901760
        %489 = vmatpush.msra.mxu0 %v488
        %v490 = vand.u32 %v372, 4294901760
        %v491 = vsub.f32 %v372, %v490
        %v492 = vand.u32 %v491, 4294901760
        %v493 = vsub.f32 %v491, %v492
        %v494 = vand.u32 %v493, 4294901760
        %495 = vmatpush.msra.mxu0 %v494
        %v496 = vand.u32 %v371, 4294901760
        %v497 = vsub.f32 %v371, %v496
        %v498 = vand.u32 %v497, 4294901760
        %v499 = vsub.f32 %v497, %v498
        %v500 = vand.u32 %v499, 4294901760
        %501 = vmatpush.msra.mxu0 %v500
        %v502 = vand.u32 %v370, 4294901760
        %v503 = vsub.f32 %v370, %v502
        %v504 = vand.u32 %v503, 4294901760
        %v505 = vsub.f32 %v503, %v504
        %v506 = vand.u32 %v505, 4294901760
        %507 = vmatpush.msra.mxu0 %v506
        %v508 = vand.u32 %v384, 4294901760
        %509 = vmatmul.f32.gmra.mxu0 %v508
        %v510 = vpop.f32.mrf.mxu0
        %v511 = vadd.f32 %v426, %v510
        %v512 = vand.u32 %v387, 4294901760
        %513 = vmatmul.f32.gmra.mxu0 %v512
        %v514 = vpop.f32.mrf.mxu0
        %v515 = vadd.f32 %v434, %v514
        %v516 = vand.u32 %v390, 4294901760
        %517 = vmatmul.f32.gmra.mxu0 %v516
        %v518 = vpop.f32.mrf.mxu0
        %v519 = vadd.f32 %v442, %v518
        %v520 = vand.u32 %v393, 4294901760
        %521 = vmatmul.f32.gmra.mxu0 %v520
        %v522 = vpop.f32.mrf.mxu0
        %v523 = vadd.f32 %v450, %v522
        %524 = vdwg.mxu0
        %525 = vmatpush.msra.mxu0 0.0
        %526 = vmatpush.msra.mxu0 0.0
        %527 = vmatpush.msra.mxu0 0.0
        %528 = vmatpush.msra.mxu0 0.0
        %529 = vmatpush.msra.mxu0 0.0
        %530 = vmatpush.msra.mxu0 0.0
        %531 = vmatpush.msra.mxu0 0.0
        %532 = vmatpush.msra.mxu0 0.0
        %v533 = vand.u32 %v377, 4294901760
        %v534 = vsub.f32 %v377, %v533
        %535 = vmatpush.msra.mxu0 %v534
        %v536 = vand.u32 %v376, 4294901760
        %v537 = vsub.f32 %v376, %v536
        %538 = vmatpush.msra.mxu0 %v537
        %v539 = vand.u32 %v375, 4294901760
        %v540 = vsub.f32 %v375, %v539
        %541 = vmatpush.msra.mxu0 %v540
        %v542 = vand.u32 %v374, 4294901760
        %v543 = vsub.f32 %v374, %v542
        %544 = vmatpush.msra.mxu0 %v543
        %v545 = vand.u32 %v373, 4294901760
        %v546 = vsub.f32 %v373, %v545
        %547 = vmatpush.msra.mxu0 %v546
        %v548 = vand.u32 %v372, 4294901760
        %v549 = vsub.f32 %v372, %v548
        %550 = vmatpush.msra.mxu0 %v549
        %v551 = vand.u32 %v371, 4294901760
        %v552 = vsub.f32 %v371, %v551
        %553 = vmatpush.msra.mxu0 %v552
        %v554 = vand.u32 %v370, 4294901760
        %v555 = vsub.f32 %v370, %v554
        %556 = vmatpush.msra.mxu0 %v555
        %v557 = vand.u32 %v384, 4294901760
        %v558 = vsub.f32 %v384, %v557
        %559 = vmatmul.f32.gmra.mxu0 %v558
        %v560 = vpop.f32.mrf.mxu0
        %v561 = vadd.f32 %v511, %v560
        %v562 = vand.u32 %v387, 4294901760
        %v563 = vsub.f32 %v387, %v562
        %564 = vmatmul.f32.gmra.mxu0 %v563
        %v565 = vpop.f32.mrf.mxu0
        %v566 = vadd.f32 %v515, %v565
        %v567 = vand.u32 %v390, 4294901760
        %v568 = vsub.f32 %v390, %v567
        %569 = vmatmul.f32.gmra.mxu0 %v568
        %v570 = vpop.f32.mrf.mxu0
        %v571 = vadd.f32 %v519, %v570
        %v572 = vand.u32 %v393, 4294901760
        %v573 = vsub.f32 %v393, %v572
        %574 = vmatmul.f32.gmra.mxu0 %v573
        %v575 = vpop.f32.mrf.mxu0
        %v576 = vadd.f32 %v523, %v575
        %577 = vdwg.mxu0
        %578 = vmatpush.msra.mxu0 0.0
        %579 = vmatpush.msra.mxu0 0.0
        %580 = vmatpush.msra.mxu0 0.0
        %581 = vmatpush.msra.mxu0 0.0
        %582 = vmatpush.msra.mxu0 0.0
        %583 = vmatpush.msra.mxu0 0.0
        %584 = vmatpush.msra.mxu0 0.0
        %585 = vmatpush.msra.mxu0 0.0
        %v586 = vand.u32 %v377, 4294901760
        %587 = vmatpush.msra.mxu0 %v586
        %v588 = vand.u32 %v376, 4294901760
        %589 = vmatpush.msra.mxu0 %v588
        %v590 = vand.u32 %v375, 4294901760
        %591 = vmatpush.msra.mxu0 %v590
        %v592 = vand.u32 %v374, 4294901760
        %593 = vmatpush.msra.mxu0 %v592
        %v594 = vand.u32 %v373, 4294901760
        %595 = vmatpush.msra.mxu0 %v594
        %v596 = vand.u32 %v372, 4294901760
        %597 = vmatpush.msra.mxu0 %v596
        %v598 = vand.u32 %v371, 4294901760
        %599 = vmatpush.msra.mxu0 %v598
        %v600 = vand.u32 %v370, 4294901760
        %601 = vmatpush.msra.mxu0 %v600
        %v602 = vand.u32 %v384, 4294901760
        %v603 = vsub.f32 %v384, %v602
        %v604 = vand.u32 %v603, 4294901760
        %605 = vmatmul.f32.gmra.mxu0 %v604
        %v606 = vpop.f32.mrf.mxu0
        %v607 = vadd.f32 %v561, %v606
        %v608 = vand.u32 %v387, 4294901760
        %v609 = vsub.f32 %v387, %v608
        %v610 = vand.u32 %v609, 4294901760
        %611 = vmatmul.f32.gmra.mxu0 %v610
        %v612 = vpop.f32.mrf.mxu0
        %v613 = vadd.f32 %v566, %v612
        %v614 = vand.u32 %v390, 4294901760
        %v615 = vsub.f32 %v390, %v614
        %v616 = vand.u32 %v615, 4294901760
        %617 = vmatmul.f32.gmra.mxu0 %v616
        %v618 = vpop.f32.mrf.mxu0
        %v619 = vadd.f32 %v571, %v618
        %v620 = vand.u32 %v393, 4294901760
        %v621 = vsub.f32 %v393, %v620
        %v622 = vand.u32 %v621, 4294901760
        %623 = vmatmul.f32.gmra.mxu0 %v622
        %v624 = vpop.f32.mrf.mxu0
        %v625 = vadd.f32 %v576, %v624
        %626 = vdwg.mxu0
        %627 = vmatpush.msra.mxu0 0.0
        %628 = vmatpush.msra.mxu0 0.0
        %629 = vmatpush.msra.mxu0 0.0
        %630 = vmatpush.msra.mxu0 0.0
        %631 = vmatpush.msra.mxu0 0.0
        %632 = vmatpush.msra.mxu0 0.0
        %633 = vmatpush.msra.mxu0 0.0
        %634 = vmatpush.msra.mxu0 0.0
        %v635 = vand.u32 %v377, 4294901760
        %v636 = vsub.f32 %v377, %v635
        %v637 = vand.u32 %v636, 4294901760
        %638 = vmatpush.msra.mxu0 %v637
        %v639 = vand.u32 %v376, 4294901760
        %v640 = vsub.f32 %v376, %v639
        %v641 = vand.u32 %v640, 4294901760
        %642 = vmatpush.msra.mxu0 %v641
        %v643 = vand.u32 %v375, 4294901760
        %v644 = vsub.f32 %v375, %v643
        %v645 = vand.u32 %v644, 4294901760
        %646 = vmatpush.msra.mxu0 %v645
        %v647 = vand.u32 %v374, 4294901760
        %v648 = vsub.f32 %v374, %v647
        %v649 = vand.u32 %v648, 4294901760
        %650 = vmatpush.msra.mxu0 %v649
        %v651 = vand.u32 %v373, 4294901760
        %v652 = vsub.f32 %v373, %v651
        %v653 = vand.u32 %v652, 4294901760
        %654 = vmatpush.msra.mxu0 %v653
        %v655 = vand.u32 %v372, 4294901760
        %v656 = vsub.f32 %v372, %v655
        %v657 = vand.u32 %v656, 4294901760
        %658 = vmatpush.msra.mxu0 %v657
        %v659 = vand.u32 %v371, 4294901760
        %v660 = vsub.f32 %v371, %v659
        %v661 = vand.u32 %v660, 4294901760
        %662 = vmatpush.msra.mxu0 %v661
        %v663 = vand.u32 %v370, 4294901760
        %v664 = vsub.f32 %v370, %v663
        %v665 = vand.u32 %v664, 4294901760
        %666 = vmatpush.msra.mxu0 %v665
        %v667 = vand.u32 %v384, 4294901760
        %668 = vmatmul.f32.gmra.mxu0 %v667
        %v669 = vpop.f32.mrf.mxu0
        %v670 = vadd.f32 %v607, %v669
        %v671 = vand.u32 %v387, 4294901760
        %672 = vmatmul.f32.gmra.mxu0 %v671
        %v673 = vpop.f32.mrf.mxu0
        %v674 = vadd.f32 %v613, %v673
        %v675 = vand.u32 %v390, 4294901760
        %676 = vmatmul.f32.gmra.mxu0 %v675
        %v677 = vpop.f32.mrf.mxu0
        %v678 = vadd.f32 %v619, %v677
        %v679 = vand.u32 %v393, 4294901760
        %680 = vmatmul.f32.gmra.mxu0 %v679
        %v681 = vpop.f32.mrf.mxu0
        %v682 = vadd.f32 %v625, %v681
        %683 = vdwg.mxu0
        %684 = vmatpush.msra.mxu0 0.0
        %685 = vmatpush.msra.mxu0 0.0
        %686 = vmatpush.msra.mxu0 0.0
        %687 = vmatpush.msra.mxu0 0.0
        %688 = vmatpush.msra.mxu0 0.0
        %689 = vmatpush.msra.mxu0 0.0
        %690 = vmatpush.msra.mxu0 0.0
        %691 = vmatpush.msra.mxu0 0.0
        %v692 = vand.u32 %v377, 4294901760
        %693 = vmatpush.msra.mxu0 %v692
        %v694 = vand.u32 %v376, 4294901760
        %695 = vmatpush.msra.mxu0 %v694
        %v696 = vand.u32 %v375, 4294901760
        %697 = vmatpush.msra.mxu0 %v696
        %v698 = vand.u32 %v374, 4294901760
        %699 = vmatpush.msra.mxu0 %v698
        %v700 = vand.u32 %v373, 4294901760
        %701 = vmatpush.msra.mxu0 %v700
        %v702 = vand.u32 %v372, 4294901760
        %703 = vmatpush.msra.mxu0 %v702
        %v704 = vand.u32 %v371, 4294901760
        %705 = vmatpush.msra.mxu0 %v704
        %v706 = vand.u32 %v370, 4294901760
        %707 = vmatpush.msra.mxu0 %v706
        %v708 = vand.u32 %v384, 4294901760
        %709 = vmatmul.f32.gmra.mxu0 %v708
        %v710 = vpop.f32.mrf.mxu0
        %v711 = vadd.f32 %v670, %v710
        %v712 = vand.u32 %v387, 4294901760
        %713 = vmatmul.f32.gmra.mxu0 %v712
        %v714 = vpop.f32.mrf.mxu0
        %v715 = vadd.f32 %v674, %v714
        %v716 = vand.u32 %v390, 4294901760
        %717 = vmatmul.f32.gmra.mxu0 %v716
        %v718 = vpop.f32.mrf.mxu0
        %v719 = vadd.f32 %v678, %v718
        %v720 = vand.u32 %v393, 4294901760
        %721 = vmatmul.f32.gmra.mxu0 %v720
        %v722 = vpop.f32.mrf.mxu0
        %v723 = vadd.f32 %v682, %v722
        %724 = vdwg.mxu0
        %v725 = vmul.f32 %v711, 0.5
        %v726 = vmul.f32 %v715, 0.5
        %v727 = vmul.f32 %v719, 0.5
        %v728 = vmul.f32 %v723, 0.5
        %v729 = vmul.f32 %v711, 0.70710677
        %v730 = vmul.f32 %v715, 0.70710677
        %v731 = vmul.f32 %v719, 0.70710677
        %v732 = vmul.f32 %v723, 0.70710677
        %v733 = vmul.f32 %v729, %v729
        %v734 = vmin.f32 16.0, %v733
        %v735 = vmul.f32 %v734, 2.1237322e-06
        %v736 = vadd.f32 %v735, 0.00028619796
        %v737 = vmul.f32 %v734, %v736
        %v738 = vadd.f32 %v737, 0.0036580483
        %v739 = vmul.f32 %v734, %v738
        %v740 = vadd.f32 %v739, 0.05243302
        %v741 = vmul.f32 %v734, %v740
        %v742 = vadd.f32 %v741, 0.18741608
        %v743 = vmul.f32 %v734, %v742
        %v744 = vadd.f32 %v743, 1.1283791
        %v745 = vmul.f32 %v729, %v744
        %v746 = vmul.f32 %v734, 3.8918573e-05
        %v747 = vadd.f32 %v746, 0.001143296
        %v748 = vmul.f32 %v734, %v747
        %v749 = vadd.f32 %v748, 0.014752088
        %v750 = vmul.f32 %v734, %v749
        %v751 = vadd.f32 %v750, 0.112945676
        %v752 = vmul.f32 %v734, %v751
        %v753 = vadd.f32 %v752, 0.4994258
        %v754 = vmul.f32 %v734, %v753
        %v755 = vadd.f32 %v754, 1.0
        %v756 = vrcp.pop %v755
        %v757 = vmul.f32 %v755, %v756
        %v758 = vsub.f32 1.0, %v757
        %v759 = vmul.f32 %v756, %v758
        %v760 = vadd.f32 %v756, %v759
        %vm761 = vweird.f32 %v755
        %vm762 = vweird.f32 %v756
        %vm763 = vmor %vm761, %vm762
        %v764 = vsel %vm763, %v756, %v760
        %v765 = vand.u32 2147483647, %v755
        %vm766 = vcmp.eq.f32.partialorder %v765, 8.507059e+37
        %v767 = vand.u32 %v755, 2147483648
        %v768 = vor.u32 1.1754944e-38, %v767
        %v769 = vsel %vm766, %v768, %v764
        %v770 = vmul.f32 %v745, %v769
        %v771 = vmin.f32 %v770, 1.0
        %v772 = vmax.f32 %v771, -1.0
        %v773 = vmul.f32 %v730, %v730
        %v774 = vmin.f32 16.0, %v773
        %v775 = vmul.f32 %v774, 2.1237322e-06
        %v776 = vadd.f32 %v775, 0.00028619796
        %v777 = vmul.f32 %v774, %v776
        %v778 = vadd.f32 %v777, 0.0036580483
        %v779 = vmul.f32 %v774, %v778
        %v780 = vadd.f32 %v779, 0.05243302
        %v781 = vmul.f32 %v774, %v780
        %v782 = vadd.f32 %v781, 0.18741608
        %v783 = vmul.f32 %v774, %v782
        %v784 = vadd.f32 %v783, 1.1283791
        %v785 = vmul.f32 %v730, %v784
        %v786 = vmul.f32 %v774, 3.8918573e-05
        %v787 = vadd.f32 %v786, 0.001143296
        %v788 = vmul.f32 %v774, %v787
        %v789 = vadd.f32 %v788, 0.014752088
        %v790 = vmul.f32 %v774, %v789
        %v791 = vadd.f32 %v790, 0.112945676
        %v792 = vmul.f32 %v774, %v791
        %v793 = vadd.f32 %v792, 0.4994258
        %v794 = vmul.f32 %v774, %v793
        %v795 = vadd.f32 %v794, 1.0
        %v796 = vrcp.pop %v795
        %v797 = vmul.f32 %v795, %v796
        %v798 = vsub.f32 1.0, %v797
        %v799 = vmul.f32 %v796, %v798
        %v800 = vadd.f32 %v796, %v799
        %vm801 = vweird.f32 %v795
        %vm802 = vweird.f32 %v796
        %vm803 = vmor %vm801, %vm802
        %v804 = vsel %vm803, %v796, %v800
        %v805 = vand.u32 2147483647, %v795
        %vm806 = vcmp.eq.f32.partialorder %v805, 8.507059e+37
        %v807 = vand.u32 %v795, 2147483648
        %v808 = vor.u32 1.1754944e-38, %v807
        %v809 = vsel %vm806, %v808, %v804
        %v810 = vmul.f32 %v785, %v809
        %v811 = vmin.f32 %v810, 1.0
        %v812 = vmax.f32 %v811, -1.0
        %v813 = vmul.f32 %v731, %v731
        %v814 = vmin.f32 16.0, %v813
        %v815 = vmul.f32 %v814, 2.1237322e-06
        %v816 = vadd.f32 %v815, 0.00028619796
        %v817 = vmul.f32 %v814, %v816
        %v818 = vadd.f32 %v817, 0.0036580483
        %v819 = vmul.f32 %v814, %v818
        %v820 = vadd.f32 %v819, 0.05243302
        %v821 = vmul.f32 %v814, %v820
        %v822 = vadd.f32 %v821, 0.18741608
        %v823 = vmul.f32 %v814, %v822
        %v824 = vadd.f32 %v823, 1.1283791
        %v825 = vmul.f32 %v731, %v824
        %v826 = vmul.f32 %v814, 3.8918573e-05
        %v827 = vadd.f32 %v826, 0.001143296
        %v828 = vmul.f32 %v814, %v827
        %v829 = vadd.f32 %v828, 0.014752088
        %v830 = vmul.f32 %v814, %v829
        %v831 = vadd.f32 %v830, 0.112945676
        %v832 = vmul.f32 %v814, %v831
        %v833 = vadd.f32 %v832, 0.4994258
        %v834 = vmul.f32 %v814, %v833
        %v835 = vadd.f32 %v834, 1.0
        %v836 = vrcp.pop %v835
        %v837 = vmul.f32 %v835, %v836
        %v838 = vsub.f32 1.0, %v837
        %v839 = vmul.f32 %v836, %v838
        %v840 = vadd.f32 %v836, %v839
        %vm841 = vweird.f32 %v835
        %vm842 = vweird.f32 %v836
        %vm843 = vmor %vm841, %vm842
        %v844 = vsel %vm843, %v836, %v840
        %v845 = vand.u32 2147483647, %v835
        %vm846 = vcmp.eq.f32.partialorder %v845, 8.507059e+37
        %v847 = vand.u32 %v835, 2147483648
        %v848 = vor.u32 1.1754944e-38, %v847
        %v849 = vsel %vm846, %v848, %v844
        %v850 = vmul.f32 %v825, %v849
        %v851 = vmin.f32 %v850, 1.0
        %v852 = vmax.f32 %v851, -1.0
        %v853 = vmul.f32 %v732, %v732
        %v854 = vmin.f32 16.0, %v853
        %v855 = vmul.f32 %v854, 2.1237322e-06
        %v856 = vadd.f32 %v855, 0.00028619796
        %v857 = vmul.f32 %v854, %v856
        %v858 = vadd.f32 %v857, 0.0036580483
        %v859 = vmul.f32 %v854, %v858
        %v860 = vadd.f32 %v859, 0.05243302
        %v861 = vmul.f32 %v854, %v860
        %v862 = vadd.f32 %v861, 0.18741608
        %v863 = vmul.f32 %v854, %v862
        %v864 = vadd.f32 %v863, 1.1283791
        %v865 = vmul.f32 %v732, %v864
        %v866 = vmul.f32 %v854, 3.8918573e-05
        %v867 = vadd.f32 %v866, 0.001143296
        %v868 = vmul.f32 %v854, %v867
        %v869 = vadd.f32 %v868, 0.014752088
        %v870 = vmul.f32 %v854, %v869
        %v871 = vadd.f32 %v870, 0.112945676
        %v872 = vmul.f32 %v854, %v871
        %v873 = vadd.f32 %v872, 0.4994258
        %v874 = vmul.f32 %v854, %v873
        %v875 = vadd.f32 %v874, 1.0
        %v876 = vrcp.pop %v875
        %v877 = vmul.f32 %v875, %v876
        %v878 = vsub.f32 1.0, %v877
        %v879 = vmul.f32 %v876, %v878
        %v880 = vadd.f32 %v876, %v879
        %vm881 = vweird.f32 %v875
        %vm882 = vweird.f32 %v876
        %vm883 = vmor %vm881, %vm882
        %v884 = vsel %vm883, %v876, %v880
        %v885 = vand.u32 2147483647, %v875
        %vm886 = vcmp.eq.f32.partialorder %v885, 8.507059e+37
        %v887 = vand.u32 %v875, 2147483648
        %v888 = vor.u32 1.1754944e-38, %v887
        %v889 = vsel %vm886, %v888, %v884
        %v890 = vmul.f32 %v865, %v889
        %v891 = vmin.f32 %v890, 1.0
        %v892 = vmax.f32 %v891, -1.0
        %v893 = vadd.f32 %v772, 1.0
        %v894 = vadd.f32 %v812, 1.0
        %v895 = vadd.f32 %v852, 1.0
        %v896 = vadd.f32 %v892, 1.0
        %v897 = vmul.f32 %v725, %v893
        %v898 = vmul.f32 %v726, %v894
        %v899 = vmul.f32 %v727, %v895
        %v900 = vmul.f32 %v728, %v896
        %v901 = vld [vmem:[#allocation2] sm:$0xff]
        %v902 = vld [vmem:[#allocation2 + $0x8] sm:$0xff]
        %v903 = vld [vmem:[#allocation2 + $0x10] sm:$0xff]
        %v904 = vld [vmem:[#allocation2 + $0x18] sm:$0xff]
        %v905 = vld [vmem:[%s354] sm:$0xff]
        %v906 = vld [vmem:[%s354 + $0x8] sm:$0xff]
        %v907 = vld [vmem:[%s354 + $0x10] sm:$0xff]
        %v908 = vld [vmem:[%s354 + $0x18] sm:$0xff]
        %v909 = vld [vmem:[%s354 + $0x20] sm:$0xff]
        %v910 = vld [vmem:[%s354 + $0x28] sm:$0xff]
        %v911 = vld [vmem:[%s354 + $0x30] sm:$0xff]
        %v912 = vld [vmem:[%s354 + $0x38] sm:$0xff]
        %v913 = vld [vmem:[%s354 + $0x40] sm:$0xff]
        %v914 = vld [vmem:[%s354 + $0x48] sm:$0xff]
        %v915 = vld [vmem:[%s354 + $0x50] sm:$0xff]
        %v916 = vld [vmem:[%s354 + $0x58] sm:$0xff]
        %v917 = vld [vmem:[%s354 + $0x60] sm:$0xff]
        %v918 = vld [vmem:[%s354 + $0x68] sm:$0xff]
        %v919 = vld [vmem:[%s354 + $0x70] sm:$0xff]
        %v920 = vld [vmem:[%s354 + $0x78] sm:$0xff]
        %v921 = vand.u32 %v920, 4294901760
        %922 = vmatpush.msra.mxu0 %v921
        %v923 = vand.u32 %v919, 4294901760
        %924 = vmatpush.msra.mxu0 %v923
        %v925 = vand.u32 %v918, 4294901760
        %926 = vmatpush.msra.mxu0 %v925
        %v927 = vand.u32 %v917, 4294901760
        %928 = vmatpush.msra.mxu0 %v927
        %v929 = vand.u32 %v916, 4294901760
        %930 = vmatpush.msra.mxu0 %v929
        %v931 = vand.u32 %v915, 4294901760
        %932 = vmatpush.msra.mxu0 %v931
        %v933 = vand.u32 %v914, 4294901760
        %934 = vmatpush.msra.mxu0 %v933
        %v935 = vand.u32 %v913, 4294901760
        %936 = vmatpush.msra.mxu0 %v935
        %v937 = vand.u32 %v912, 4294901760
        %938 = vmatpush.msra.mxu0 %v937
        %v939 = vand.u32 %v911, 4294901760
        %940 = vmatpush.msra.mxu0 %v939
        %v941 = vand.u32 %v910, 4294901760
        %942 = vmatpush.msra.mxu0 %v941
        %v943 = vand.u32 %v909, 4294901760
        %944 = vmatpush.msra.mxu0 %v943
        %v945 = vand.u32 %v908, 4294901760
        %946 = vmatpush.msra.mxu0 %v945
        %v947 = vand.u32 %v907, 4294901760
        %948 = vmatpush.msra.mxu0 %v947
        %v949 = vand.u32 %v906, 4294901760
        %950 = vmatpush.msra.mxu0 %v949
        %v951 = vand.u32 %v905, 4294901760
        %952 = vmatpush.msra.mxu0 %v951
        %v953 = vand.u32 %v897, 4294901760
        %v954 = vsub.f32 %v897, %v953
        %v955 = vand.u32 %v954, 4294901760
        %v956 = vsub.f32 %v954, %v955
        %v957 = vand.u32 %v956, 4294901760
        %958 = vmatmul.f32.gmra.mxu0 %v957
        %v959 = vpop.f32.mrf.mxu0
        %v960 = vadd.f32 0.0, %v959
        %v961 = vand.u32 %v898, 4294901760
        %v962 = vsub.f32 %v898, %v961
        %v963 = vand.u32 %v962, 4294901760
        %v964 = vsub.f32 %v962, %v963
        %v965 = vand.u32 %v964, 4294901760
        %966 = vmatmul.f32.gmra.mxu0 %v965
        %v967 = vpop.f32.mrf.mxu0
        %v968 = vadd.f32 0.0, %v967
        %v969 = vand.u32 %v899, 4294901760
        %v970 = vsub.f32 %v899, %v969
        %v971 = vand.u32 %v970, 4294901760
        %v972 = vsub.f32 %v970, %v971
        %v973 = vand.u32 %v972, 4294901760
        %974 = vmatmul.f32.gmra.mxu0 %v973
        %v975 = vpop.f32.mrf.mxu0
        %v976 = vadd.f32 0.0, %v975
        %v977 = vand.u32 %v900, 4294901760
        %v978 = vsub.f32 %v900, %v977
        %v979 = vand.u32 %v978, 4294901760
        %v980 = vsub.f32 %v978, %v979
        %v981 = vand.u32 %v980, 4294901760
        %982 = vmatmul.f32.gmra.mxu0 %v981
        %v983 = vpop.f32.mrf.mxu0
        %v984 = vadd.f32 0.0, %v983
        %985 = vdwg.mxu0
        %v986 = vand.u32 %v920, 4294901760
        %v987 = vsub.f32 %v920, %v986
        %v988 = vand.u32 %v987, 4294901760
        %v989 = vsub.f32 %v987, %v988
        %v990 = vand.u32 %v989, 4294901760
        %991 = vmatpush.msra.mxu0 %v990
        %v992 = vand.u32 %v919, 4294901760
        %v993 = vsub.f32 %v919, %v992
        %v994 = vand.u32 %v993, 4294901760
        %v995 = vsub.f32 %v993, %v994
        %v996 = vand.u32 %v995, 4294901760
        %997 = vmatpush.msra.mxu0 %v996
        %v998 = vand.u32 %v918, 4294901760
        %v999 = vsub.f32 %v918, %v998
        %v1000 = vand.u32 %v999, 4294901760
        %v1001 = vsub.f32 %v999, %v1000
        %v1002 = vand.u32 %v1001, 4294901760
        %1003 = vmatpush.msra.mxu0 %v1002
        %v1004 = vand.u32 %v917, 4294901760
        %v1005 = vsub.f32 %v917, %v1004
        %v1006 = vand.u32 %v1005, 4294901760
        %v1007 = vsub.f32 %v1005, %v1006
        %v1008 = vand.u32 %v1007, 4294901760
        %1009 = vmatpush.msra.mxu0 %v1008
        %v1010 = vand.u32 %v916, 4294901760
        %v1011 = vsub.f32 %v916, %v1010
        %v1012 = vand.u32 %v1011, 4294901760
        %v1013 = vsub.f32 %v1011, %v1012
        %v1014 = vand.u32 %v1013, 4294901760
        %1015 = vmatpush.msra.mxu0 %v1014
        %v1016 = vand.u32 %v915, 4294901760
        %v1017 = vsub.f32 %v915, %v1016
        %v1018 = vand.u32 %v1017, 4294901760
        %v1019 = vsub.f32 %v1017, %v1018
        %v1020 = vand.u32 %v1019, 4294901760
        %1021 = vmatpush.msra.mxu0 %v1020
        %v1022 = vand.u32 %v914, 4294901760
        %v1023 = vsub.f32 %v914, %v1022
        %v1024 = vand.u32 %v1023, 4294901760
        %v1025 = vsub.f32 %v1023, %v1024
        %v1026 = vand.u32 %v1025, 4294901760
        %1027 = vmatpush.msra.mxu0 %v1026
        %v1028 = vand.u32 %v913, 4294901760
        %v1029 = vsub.f32 %v913, %v1028
        %v1030 = vand.u32 %v1029, 4294901760
        %v1031 = vsub.f32 %v1029, %v1030
        %v1032 = vand.u32 %v1031, 4294901760
        %1033 = vmatpush.msra.mxu0 %v1032
        %v1034 = vand.u32 %v912, 4294901760
        %v1035 = vsub.f32 %v912, %v1034
        %v1036 = vand.u32 %v1035, 4294901760
        %v1037 = vsub.f32 %v1035, %v1036
        %v1038 = vand.u32 %v1037, 4294901760
        %1039 = vmatpush.msra.mxu0 %v1038
        %v1040 = vand.u32 %v911, 4294901760
        %v1041 = vsub.f32 %v911, %v1040
        %v1042 = vand.u32 %v1041, 4294901760
        %v1043 = vsub.f32 %v1041, %v1042
        %v1044 = vand.u32 %v1043, 4294901760
        %1045 = vmatpush.msra.mxu0 %v1044
        %v1046 = vand.u32 %v910, 4294901760
        %v1047 = vsub.f32 %v910, %v1046
        %v1048 = vand.u32 %v1047, 4294901760
        %v1049 = vsub.f32 %v1047, %v1048
        %v1050 = vand.u32 %v1049, 4294901760
        %1051 = vmatpush.msra.mxu0 %v1050
        %v1052 = vand.u32 %v909, 4294901760
        %v1053 = vsub.f32 %v909, %v1052
        %v1054 = vand.u32 %v1053, 4294901760
        %v1055 = vsub.f32 %v1053, %v1054
        %v1056 = vand.u32 %v1055, 4294901760
        %1057 = vmatpush.msra.mxu0 %v1056
        %v1058 = vand.u32 %v908, 4294901760
        %v1059 = vsub.f32 %v908, %v1058
        %v1060 = vand.u32 %v1059, 4294901760
        %v1061 = vsub.f32 %v1059, %v1060
        %v1062 = vand.u32 %v1061, 4294901760
        %1063 = vmatpush.msra.mxu0 %v1062
        %v1064 = vand.u32 %v907, 4294901760
        %v1065 = vsub.f32 %v907, %v1064
        %v1066 = vand.u32 %v1065, 4294901760
        %v1067 = vsub.f32 %v1065, %v1066
        %v1068 = vand.u32 %v1067, 4294901760
        %1069 = vmatpush.msra.mxu0 %v1068
        %v1070 = vand.u32 %v906, 4294901760
        %v1071 = vsub.f32 %v906, %v1070
        %v1072 = vand.u32 %v1071, 4294901760
        %v1073 = vsub.f32 %v1071, %v1072
        %v1074 = vand.u32 %v1073, 4294901760
        %1075 = vmatpush.msra.mxu0 %v1074
        %v1076 = vand.u32 %v905, 4294901760
        %v1077 = vsub.f32 %v905, %v1076
        %v1078 = vand.u32 %v1077, 4294901760
        %v1079 = vsub.f32 %v1077, %v1078
        %v1080 = vand.u32 %v1079, 4294901760
        %1081 = vmatpush.msra.mxu0 %v1080
        %v1082 = vand.u32 %v897, 4294901760
        %1083 = vmatmul.f32.gmra.mxu0 %v1082
        %v1084 = vpop.f32.mrf.mxu0
        %v1085 = vadd.f32 %v960, %v1084
        %v1086 = vand.u32 %v898, 4294901760
        %1087 = vmatmul.f32.gmra.mxu0 %v1086
        %v1088 = vpop.f32.mrf.mxu0
        %v1089 = vadd.f32 %v968, %v1088
        %v1090 = vand.u32 %v899, 4294901760
        %1091 = vmatmul.f32.gmra.mxu0 %v1090
        %v1092 = vpop.f32.mrf.mxu0
        %v1093 = vadd.f32 %v976, %v1092
        %v1094 = vand.u32 %v900, 4294901760
        %1095 = vmatmul.f32.gmra.mxu0 %v1094
        %v1096 = vpop.f32.mrf.mxu0
        %v1097 = vadd.f32 %v984, %v1096
        %1098 = vdwg.mxu0
        %v1099 = vand.u32 %v920, 4294901760
        %v1100 = vsub.f32 %v920, %v1099
        %1101 = vmatpush.msra.mxu0 %v1100
        %v1102 = vand.u32 %v919, 4294901760
        %v1103 = vsub.f32 %v919, %v1102
        %1104 = vmatpush.msra.mxu0 %v1103
        %v1105 = vand.u32 %v918, 4294901760
        %v1106 = vsub.f32 %v918, %v1105
        %1107 = vmatpush.msra.mxu0 %v1106
        %v1108 = vand.u32 %v917, 4294901760
        %v1109 = vsub.f32 %v917, %v1108
        %1110 = vmatpush.msra.mxu0 %v1109
        %v1111 = vand.u32 %v916, 4294901760
        %v1112 = vsub.f32 %v916, %v1111
        %1113 = vmatpush.msra.mxu0 %v1112
        %v1114 = vand.u32 %v915, 4294901760
        %v1115 = vsub.f32 %v915, %v1114
        %1116 = vmatpush.msra.mxu0 %v1115
        %v1117 = vand.u32 %v914, 4294901760
        %v1118 = vsub.f32 %v914, %v1117
        %1119 = vmatpush.msra.mxu0 %v1118
        %v1120 = vand.u32 %v913, 4294901760
        %v1121 = vsub.f32 %v913, %v1120
        %1122 = vmatpush.msra.mxu0 %v1121
        %v1123 = vand.u32 %v912, 4294901760
        %v1124 = vsub.f32 %v912, %v1123
        %1125 = vmatpush.msra.mxu0 %v1124
        %v1126 = vand.u32 %v911, 4294901760
        %v1127 = vsub.f32 %v911, %v1126
        %1128 = vmatpush.msra.mxu0 %v1127
        %v1129 = vand.u32 %v910, 4294901760
        %v1130 = vsub.f32 %v910, %v1129
        %1131 = vmatpush.msra.mxu0 %v1130
        %v1132 = vand.u32 %v909, 4294901760
        %v1133 = vsub.f32 %v909, %v1132
        %1134 = vmatpush.msra.mxu0 %v1133
        %v1135 = vand.u32 %v908, 4294901760
        %v1136 = vsub.f32 %v908, %v1135
        %1137 = vmatpush.msra.mxu0 %v1136
        %v1138 = vand.u32 %v907, 4294901760
        %v1139 = vsub.f32 %v907, %v1138
        %1140 = vmatpush.msra.mxu0 %v1139
        %v1141 = vand.u32 %v906, 4294901760
        %v1142 = vsub.f32 %v906, %v1141
        %1143 = vmatpush.msra.mxu0 %v1142
        %v1144 = vand.u32 %v905, 4294901760
        %v1145 = vsub.f32 %v905, %v1144
        %1146 = vmatpush.msra.mxu0 %v1145
        %v1147 = vand.u32 %v897, 4294901760
        %v1148 = vsub.f32 %v897, %v1147
        %1149 = vmatmul.f32.gmra.mxu0 %v1148
        %v1150 = vpop.f32.mrf.mxu0
        %v1151 = vadd.f32 %v1085, %v1150
        %v1152 = vand.u32 %v898, 4294901760
        %v1153 = vsub.f32 %v898, %v1152
        %1154 = vmatmul.f32.gmra.mxu0 %v1153
        %v1155 = vpop.f32.mrf.mxu0
        %v1156 = vadd.f32 %v1089, %v1155
        %v1157 = vand.u32 %v899, 4294901760
        %v1158 = vsub.f32 %v899, %v1157
        %1159 = vmatmul.f32.gmra.mxu0 %v1158
        %v1160 = vpop.f32.mrf.mxu0
        %v1161 = vadd.f32 %v1093, %v1160
        %v1162 = vand.u32 %v900, 4294901760
        %v1163 = vsub.f32 %v900, %v1162
        %1164 = vmatmul.f32.gmra.mxu0 %v1163
        %v1165 = vpop.f32.mrf.mxu0
        %v1166 = vadd.f32 %v1097, %v1165
        %1167 = vdwg.mxu0
        %v1168 = vand.u32 %v920, 4294901760
        %1169 = vmatpush.msra.mxu0 %v1168
        %v1170 = vand.u32 %v919, 4294901760
        %1171 = vmatpush.msra.mxu0 %v1170
        %v1172 = vand.u32 %v918, 4294901760
        %1173 = vmatpush.msra.mxu0 %v1172
        %v1174 = vand.u32 %v917, 4294901760
        %1175 = vmatpush.msra.mxu0 %v1174
        %v1176 = vand.u32 %v916, 4294901760
        %1177 = vmatpush.msra.mxu0 %v1176
        %v1178 = vand.u32 %v915, 4294901760
        %1179 = vmatpush.msra.mxu0 %v1178
        %v1180 = vand.u32 %v914, 4294901760
        %1181 = vmatpush.msra.mxu0 %v1180
        %v1182 = vand.u32 %v913, 4294901760
        %1183 = vmatpush.msra.mxu0 %v1182
        %v1184 = vand.u32 %v912, 4294901760
        %1185 = vmatpush.msra.mxu0 %v1184
        %v1186 = vand.u32 %v911, 4294901760
        %1187 = vmatpush.msra.mxu0 %v1186
        %v1188 = vand.u32 %v910, 4294901760
        %1189 = vmatpush.msra.mxu0 %v1188
        %v1190 = vand.u32 %v909, 4294901760
        %1191 = vmatpush.msra.mxu0 %v1190
        %v1192 = vand.u32 %v908, 4294901760
        %1193 = vmatpush.msra.mxu0 %v1192
        %v1194 = vand.u32 %v907, 4294901760
        %1195 = vmatpush.msra.mxu0 %v1194
        %v1196 = vand.u32 %v906, 4294901760
        %1197 = vmatpush.msra.mxu0 %v1196
        %v1198 = vand.u32 %v905, 4294901760
        %1199 = vmatpush.msra.mxu0 %v1198
        %v1200 = vand.u32 %v897, 4294901760
        %v1201 = vsub.f32 %v897, %v1200
        %v1202 = vand.u32 %v1201, 4294901760
        %1203 = vmatmul.f32.gmra.mxu0 %v1202
        %v1204 = vpop.f32.mrf.mxu0
        %v1205 = vadd.f32 %v1151, %v1204
        %v1206 = vand.u32 %v898, 4294901760
        %v1207 = vsub.f32 %v898, %v1206
        %v1208 = vand.u32 %v1207, 4294901760
        %1209 = vmatmul.f32.gmra.mxu0 %v1208
        %v1210 = vpop.f32.mrf.mxu0
        %v1211 = vadd.f32 %v1156, %v1210
        %v1212 = vand.u32 %v899, 4294901760
        %v1213 = vsub.f32 %v899, %v1212
        %v1214 = vand.u32 %v1213, 4294901760
        %1215 = vmatmul.f32.gmra.mxu0 %v1214
        %v1216 = vpop.f32.mrf.mxu0
        %v1217 = vadd.f32 %v1161, %v1216
        %v1218 = vand.u32 %v900, 4294901760
        %v1219 = vsub.f32 %v900, %v1218
        %v1220 = vand.u32 %v1219, 4294901760
        %1221 = vmatmul.f32.gmra.mxu0 %v1220
        %v1222 = vpop.f32.mrf.mxu0
        %v1223 = vadd.f32 %v1166, %v1222
        %1224 = vdwg.mxu0
        %v1225 = vand.u32 %v920, 4294901760
        %v1226 = vsub.f32 %v920, %v1225
        %v1227 = vand.u32 %v1226, 4294901760
        %1228 = vmatpush.msra.mxu0 %v1227
        %v1229 = vand.u32 %v919, 4294901760
        %v1230 = vsub.f32 %v919, %v1229
        %v1231 = vand.u32 %v1230, 4294901760
        %1232 = vmatpush.msra.mxu0 %v1231
        %v1233 = vand.u32 %v918, 4294901760
        %v1234 = vsub.f32 %v918, %v1233
        %v1235 = vand.u32 %v1234, 4294901760
        %1236 = vmatpush.msra.mxu0 %v1235
        %v1237 = vand.u32 %v917, 4294901760
        %v1238 = vsub.f32 %v917, %v1237
        %v1239 = vand.u32 %v1238, 4294901760
        %1240 = vmatpush.msra.mxu0 %v1239
        %v1241 = vand.u32 %v916, 4294901760
        %v1242 = vsub.f32 %v916, %v1241
        %v1243 = vand.u32 %v1242, 4294901760
        %1244 = vmatpush.msra.mxu0 %v1243
        %v1245 = vand.u32 %v915, 4294901760
        %v1246 = vsub.f32 %v915, %v1245
        %v1247 = vand.u32 %v1246, 4294901760
        %1248 = vmatpush.msra.mxu0 %v1247
        %v1249 = vand.u32 %v914, 4294901760
        %v1250 = vsub.f32 %v914, %v1249
        %v1251 = vand.u32 %v1250, 4294901760
        %1252 = vmatpush.msra.mxu0 %v1251
        %v1253 = vand.u32 %v913, 4294901760
        %v1254 = vsub.f32 %v913, %v1253
        %v1255 = vand.u32 %v1254, 4294901760
        %1256 = vmatpush.msra.mxu0 %v1255
        %v1257 = vand.u32 %v912, 4294901760
        %v1258 = vsub.f32 %v912, %v1257
        %v1259 = vand.u32 %v1258, 4294901760
        %1260 = vmatpush.msra.mxu0 %v1259
        %v1261 = vand.u32 %v911, 4294901760
        %v1262 = vsub.f32 %v911, %v1261
        %v1263 = vand.u32 %v1262, 4294901760
        %1264 = vmatpush.msra.mxu0 %v1263
        %v1265 = vand.u32 %v910, 4294901760
        %v1266 = vsub.f32 %v910, %v1265
        %v1267 = vand.u32 %v1266, 4294901760
        %1268 = vmatpush.msra.mxu0 %v1267
        %v1269 = vand.u32 %v909, 4294901760
        %v1270 = vsub.f32 %v909, %v1269
        %v1271 = vand.u32 %v1270, 4294901760
        %1272 = vmatpush.msra.mxu0 %v1271
        %v1273 = vand.u32 %v908, 4294901760
        %v1274 = vsub.f32 %v908, %v1273
        %v1275 = vand.u32 %v1274, 4294901760
        %1276 = vmatpush.msra.mxu0 %v1275
        %v1277 = vand.u32 %v907, 4294901760
        %v1278 = vsub.f32 %v907, %v1277
        %v1279 = vand.u32 %v1278, 4294901760
        %1280 = vmatpush.msra.mxu0 %v1279
        %v1281 = vand.u32 %v906, 4294901760
        %v1282 = vsub.f32 %v906, %v1281
        %v1283 = vand.u32 %v1282, 4294901760
        %1284 = vmatpush.msra.mxu0 %v1283
        %v1285 = vand.u32 %v905, 4294901760
        %v1286 = vsub.f32 %v905, %v1285
        %v1287 = vand.u32 %v1286, 4294901760
        %1288 = vmatpush.msra.mxu0 %v1287
        %v1289 = vand.u32 %v897, 4294901760
        %1290 = vmatmul.f32.gmra.mxu0 %v1289
        %v1291 = vpop.f32.mrf.mxu0
        %v1292 = vadd.f32 %v1205, %v1291
        %v1293 = vand.u32 %v898, 4294901760
        %1294 = vmatmul.f32.gmra.mxu0 %v1293
        %v1295 = vpop.f32.mrf.mxu0
        %v1296 = vadd.f32 %v1211, %v1295
        %v1297 = vand.u32 %v899, 4294901760
        %1298 = vmatmul.f32.gmra.mxu0 %v1297
        %v1299 = vpop.f32.mrf.mxu0
        %v1300 = vadd.f32 %v1217, %v1299
        %v1301 = vand.u32 %v900, 4294901760
        %1302 = vmatmul.f32.gmra.mxu0 %v1301
        %v1303 = vpop.f32.mrf.mxu0
        %v1304 = vadd.f32 %v1223, %v1303
        %1305 = vdwg.mxu0
        %v1306 = vand.u32 %v920, 4294901760
        %1307 = vmatpush.msra.mxu0 %v1306
        %v1308 = vand.u32 %v919, 4294901760
        %1309 = vmatpush.msra.mxu0 %v1308
        %v1310 = vand.u32 %v918, 4294901760
        %1311 = vmatpush.msra.mxu0 %v1310
        %v1312 = vand.u32 %v917, 4294901760
        %1313 = vmatpush.msra.mxu0 %v1312
        %v1314 = vand.u32 %v916, 4294901760
        %1315 = vmatpush.msra.mxu0 %v1314
        %v1316 = vand.u32 %v915, 4294901760
        %1317 = vmatpush.msra.mxu0 %v1316
        %v1318 = vand.u32 %v914, 4294901760
        %1319 = vmatpush.msra.mxu0 %v1318
        %v1320 = vand.u32 %v913, 4294901760
        %1321 = vmatpush.msra.mxu0 %v1320
        %v1322 = vand.u32 %v912, 4294901760
        %1323 = vmatpush.msra.mxu0 %v1322
        %v1324 = vand.u32 %v911, 4294901760
        %1325 = vmatpush.msra.mxu0 %v1324
        %v1326 = vand.u32 %v910, 4294901760
        %1327 = vmatpush.msra.mxu0 %v1326
        %v1328 = vand.u32 %v909, 4294901760
        %1329 = vmatpush.msra.mxu0 %v1328
        %v1330 = vand.u32 %v908, 4294901760
        %1331 = vmatpush.msra.mxu0 %v1330
        %v1332 = vand.u32 %v907, 4294901760
        %1333 = vmatpush.msra.mxu0 %v1332
        %v1334 = vand.u32 %v906, 4294901760
        %1335 = vmatpush.msra.mxu0 %v1334
        %v1336 = vand.u32 %v905, 4294901760
        %1337 = vmatpush.msra.mxu0 %v1336
        %v1338 = vand.u32 %v897, 4294901760
        %1339 = vmatmul.f32.gmra.mxu0 %v1338
        %v1340 = vpop.f32.mrf.mxu0
        %v1341 = vadd.f32 %v1292, %v1340
        %v1342 = vand.u32 %v898, 4294901760
        %1343 = vmatmul.f32.gmra.mxu0 %v1342
        %v1344 = vpop.f32.mrf.mxu0
        %v1345 = vadd.f32 %v1296, %v1344
        %v1346 = vand.u32 %v899, 4294901760
        %1347 = vmatmul.f32.gmra.mxu0 %v1346
        %v1348 = vpop.f32.mrf.mxu0
        %v1349 = vadd.f32 %v1300, %v1348
        %v1350 = vand.u32 %v900, 4294901760
        %1351 = vmatmul.f32.gmra.mxu0 %v1350
        %v1352 = vpop.f32.mrf.mxu0
        %v1353 = vadd.f32 %v1304, %v1352
        %1354 = vdwg.mxu0
        %v1355 = vadd.f32 %v901, %v1341
        %v1356 = vadd.f32 %v902, %v1345
        %v1357 = vadd.f32 %v903, %v1349
        %v1358 = vadd.f32 %v904, %v1353
        %1359 = vst.msk [vmem:[#allocation2] sm:$0xff] %vm382, %v1355
        %1360 = vst.msk [vmem:[#allocation2 + $0x8] sm:$0xff] %vm382, %v1356
        %1361 = vst.msk [vmem:[#allocation2 + $0x10] sm:$0xff] %vm382, %v1357
        %1362 = vst.msk [vmem:[#allocation2 + $0x18] sm:$0xff] %vm382, %v1358
        %p1363 = scmp.eq.s32.totalorder %s24, 1
        // Predicated region
        $region83: #{tpu_custom_call.1} parent=73 // pred_check
          %p1364 = pneg %p1363
        $region84: #{tpu_custom_call.1} parent=73 // pred_check_branch
          %1366 = sbr.rel (%p1364) target = $region86
        $region85: #{tpu_custom_call.1} parent=73 // pred_region
          %v1367 = vld [vmem:[#allocation2] sm:$0xff]
          %v1368 = vld [vmem:[#allocation2 + $0x8] sm:$0xff]
          %v1369 = vld [vmem:[#allocation2 + $0x10] sm:$0xff]
          %v1370 = vld [vmem:[#allocation2 + $0x18] sm:$0xff]
          %v1371 = vld [vmem:[%s4] sm:$0x1]
          %v1373 = vperm.slane %v1371, 0
          %v1375 = vadd.f32 %v1367, %v1373
          %v1376 = vadd.f32 %v1368, %v1373
          %v1377 = vadd.f32 %v1369, %v1373
          %v1378 = vadd.f32 %v1370, %v1373
          %1379 = vst.msk [vmem:[%s340] sm:$0xff] %vm382, %v1375
          %1380 = vst.msk [vmem:[%s340 + $0x8] sm:$0xff] %vm382, %v1376
          %1381 = vst.msk [vmem:[%s340 + $0x10] sm:$0xff] %vm382, %v1377
          %1382 = vst.msk [vmem:[%s340 + $0x18] sm:$0xff] %vm382, %v1378
        $region86: #{tpu_custom_call.1} parent=73 // pred_fallthru
          _
        %s1383 = sand.u32 %s164, 1
        %s1384 = scalar_lea.sflag [#allocation5], %s1383
        %s1385 = sand.u32 %s164, 1
        %s1386 = smul.addr %s1385, 32
        %s1387 = scalar_lea.vmem [#allocation4], %s1386
        // Predicated region
        $region87: #{tpu_custom_call.1} parent=73 // pred_check
          %p1388 = pneg %p174
        $region88: #{tpu_custom_call.1} parent=73 // pred_check_branch
          %1390 = sbr.rel (%p1388) target = $region90
        $region89: #{tpu_custom_call.1} parent=73 // pred_region
          %s1391 = smul.u32 4, %s23
          %1393 = vsyncadd %s1384, 0
          %s1394 = smul.addr %s1391, 8
          %s1395 = scalar_lea.hbm %s5, %s1394
          %s1396 = sshll.u32 %s1387, 4
          %s1397 = int_to_ptr.vmem [resolvable:$true] %s1396
          %s1398 = sshll.u32 %s1395, 4
          %s1399 = int_to_ptr.hbm [resolvable:$true] %s1398
          %1404 = dma.vmem_to_hbm [thread:$0]  %s1397, 512, %s1399, %s1384, 128, 128, 8
        $region90: #{tpu_custom_call.1} parent=73 // pred_fallthru
          _
      $region74: #{tpu_custom_call.1} parent=5 // pred_fallthru
        _
      %p1405 = scmp.le.s32.totalorder 2, %s14
      // Predicated region
      $region91: #{tpu_custom_call.1} parent=5 // pred_check
        %p1406 = pneg %p1405
      $region92: #{tpu_custom_call.1} parent=5 // pred_check_branch
        %1408 = sbr.rel (%p1406) target = $region94
      $region93: #{tpu_custom_call.1} parent=5 // pred_region
        %s1409 = ssub.s32 %s14, 2
        // Predicated region
        $region95: #{tpu_custom_call.1} parent=93 // pred_check
          %p1410 = pneg %p180
        $region96: #{tpu_custom_call.1} parent=93 // pred_check_branch
          %1412 = sbr.rel (%p1410) target = $region98
        $region97: #{tpu_custom_call.1} parent=93 // pred_region
          %s1413 = sand.u32 %s165, 1
          %s1414 = scalar_lea.sflag [#allocation5], %s1413
          %s1415 = sand.u32 %s165, 1
          %s1416 = smul.addr %s1415, 32
          %s1417 = scalar_lea.vmem [#allocation4], %s1416
          %1419 = dma.done %s1414, 512
        $region98: #{tpu_custom_call.1} parent=93 // pred_fallthru
          _
      $region94: #{tpu_custom_call.1} parent=5 // pred_fallthru
        _
    $region6: #{tpu_custom_call.1} parent=1 // loop_footer
      %s18 = sadd.s32 1, %s14
    $region7: #{tpu_custom_call.1} parent=1 // loop_footer_branch
      %13 = sbr.rel target = $region3
    $region8: #{tpu_custom_call.1} parent=1 // loop_exit
      _
    %1420 = vsyncpa [#allocation5], 1
    %s1421 = scalar_lea.sflag [#allocation5], 1
    %1422 = vsyncpa %s1421, 1

</llo_original>
